<compile_context>
chip_gen: v6e
topology: v6e:2x2x1
jax: 0.10.0
libtpu: 0.0.40
codegen_flags: <defaults>
</compile_context>

<pallas_src>
import functools

import jax
import jax.numpy as jnp
from jax import lax
from jax.experimental import pallas as pl
from jax.experimental.pallas import tpu as pltpu

_SQRT_2_INV = 0.7071067811865476
_BN_EPS = 1e-5
_LANE = 128
_MBLK_MAX = 256


def _round_up(x, m):
    return ((x + m - 1) // m) * m


def _gelu(x):
    # Exact (erf-based) GELU matching nn.GELU(approximate='none').
    # erf via Abramowitz & Stegun 7.1.26 (|err| < 1.5e-7); reciprocal and exp
    # run on the EUP so the VALU polynomial stays short.
    a1, a2, a3, a4, a5 = (0.254829592, -0.284496736, 1.421413741,
                          -1.453152027, 1.061405429)
    z = jnp.abs(x) * _SQRT_2_INV
    t = pl.reciprocal(1.0 + 0.3275911 * z, approx=True)
    poly = ((((a5 * t + a4) * t + a3) * t + a2) * t + a1) * t
    erf_abs = 1.0 - poly * jnp.exp(-z * z)
    erf_val = jnp.where(x >= 0.0, erf_abs, -erf_abs)
    return 0.5 * x * (1.0 + erf_val)


# ----------------------------- Pallas kernel ------------------------------ #
def _pool_convblock_kernel(xs_ref, w1_ref, s1_ref, w2_ref, s2_ref, o_ref,
                           h_ref, hs_ref, *,
                           wp, coutp, mblk, nblk1, nblk2, rows_hs):
    """Fused ConvBlock on one flattened, 2x2-max-pooled NHWC image.

    xs_ref : (rows_xs, 3*Cin)  bf16  kw-packed pooled input (built in wrapper)
    h_ref  : (rows_h, Coutp)   bf16  conv1 activation (VMEM only)
    hs_ref : (rows_hs, 3*Coutp)bf16  kw-packed conv1 activation
    o_ref  : (m2_pad, Coutp)   bf16  conv2 output (junk rows/cols cropped later)

    Each conv = 3 MXU matmuls (one per kh) with K = 3*channels, accumulated in
    f32, M-tiled by `mblk` rows so accumulator + GELU temps stay in vregs.
    """
    # ---- conv1 + BN(shift) + GELU ----
    def conv1_block(i, carry):
        m0 = pl.multiple_of(i * mblk, 8)
        acc = jnp.zeros((mblk, coutp), jnp.float32)
        for kh in range(3):
            a = xs_ref[pl.ds(m0 + kh * wp, mblk), :]          # (mblk, 3*Cin)
            acc = acc + jnp.dot(a, w1_ref[kh],
                                preferred_element_type=jnp.float32)
        h_ref[pl.ds(m0, mblk), :] = _gelu(acc + s1_ref[...]).astype(jnp.bfloat16)
        return carry

    lax.fori_loop(0, nblk1, conv1_block, 0, unroll=nblk1 <= 8)

    # ---- kw-packed slab of the conv1 activation (128-lane aligned stores) ----
    for kw in range(3):
        hs_ref[:, kw * coutp:(kw + 1) * coutp] = h_ref[pl.ds(kw, rows_hs), :]

    # ---- conv2 + BN(shift) + GELU, lane-dense bf16 output ----
    def conv2_block(i, carry):
        m0 = pl.multiple_of(i * mblk, 8)
        acc = jnp.zeros((mblk, coutp), jnp.float32)
        for kh in range(3):
            a = hs_ref[pl.ds(m0 + kh * wp, mblk), :]          # (mblk, 3*Coutp)
            acc = acc + jnp.dot(a, w2_ref[kh],
                                preferred_element_type=jnp.float32)
        o_ref[pl.ds(m0, mblk), :] = _gelu(acc + s2_ref[...]).astype(o_ref.dtype)
        return carry

    lax.fori_loop(0, nblk2, conv2_block, 0, unroll=nblk2 <= 8)


# ------------------------------ glue (JAX) -------------------------------- #
def _fold_conv_bn(w, b, bn, cin_pad, cout_pad):
    """Fold eval-mode BN scale into conv weights.

    Returns K-packed bf16 taps of shape (3, 3*cin_pad, cout_pad) (kh major,
    kw*cin_pad + cin minor along K) and an f32 (1, cout_pad) shift."""
    cout, cin = w.shape[0], w.shape[1]
    gamma, beta, mean, var = bn
    inv = gamma * lax.rsqrt(var + _BN_EPS)
    wt = jnp.transpose(w, (2, 3, 1, 0)) * inv[None, None, None, :]   # (kh,kw,cin,cout)
    wt = jnp.pad(wt, ((0, 0), (0, 0), (0, cin_pad - cin), (0, cout_pad - cout)))
    wt = wt.reshape(3, 3 * cin_pad, cout_pad).astype(jnp.bfloat16)
    shift = (b - mean) * inv + beta
    shift = jnp.pad(shift, (0, cout_pad - cout)).reshape(1, cout_pad)
    return wt, shift.astype(jnp.float32)


def downsample_forward(params, x):
    """MaxPool2d(2) + ConvBlock (eval-mode BN), NCHW in / NCHW out."""
    N, cin, H, W = x.shape
    hp, wp = H // 2, W // 2
    cout = params["w1"].shape[0]
    assert hp >= 5 and wp >= 5, "need >=5x5 after pooling for two valid 3x3 convs"
    ho2, wo2 = hp - 4, wp - 4
    coutp = _round_up(cout, _LANE)                      # lane-dense channels

    # Row geometry of the flattened (row stride = wp) activations; all halo /
    # padding amounts are derived exactly from the maximum in-kernel read.
    m2 = ho2 * wp                                       # conv2 rows (junk cols cropped later)
    mblk = _MBLK_MAX if m2 > _MBLK_MAX else _round_up(max(m2, 8), 8)
    m2_pad = _round_up(m2, mblk)                        # conv2 rows computed (M-tiled)
    rows_h = _round_up(m2_pad + 2 * wp + 2, mblk)       # conv1 rows computed
    rows_hs = m2_pad + 2 * wp                           # conv2 kw-slab rows
    rows_xs = rows_h + 2 * wp                           # conv1 kw-slab rows
    lx = rows_xs + 2                                    # pooled flat rows incl. zero halo
    nblk1, nblk2 = rows_h // mblk, m2_pad // mblk

    # --- module boundary: maxpool(2) in NCHW, cast bf16, then NHWC + flatten ---
    xpool = x[:, :, :2 * hp, :2 * wp].reshape(N, cin, hp, 2, wp, 2).max(axis=(3, 5))
    xpool = xpool.astype(jnp.bfloat16)
    xflat = jnp.transpose(xpool, (0, 2, 3, 1)).reshape(N, hp * wp, cin)
    xflat = jnp.pad(xflat, ((0, 0), (0, lx - hp * wp), (0, 0)))
    # kw-packed (K = 3*Cin) input slab, fused into the same XLA preprocessing.
    xs = jnp.concatenate([xflat[:, k:k + rows_xs, :] for k in range(3)], axis=-1)

    # --- fold BN scale into bf16 K-packed weights; per-channel shifts stay f32 ---
    w1m, s1 = _fold_conv_bn(params["w1"], params["b1"], params["bn1"], cin, coutp)
    w2m, s2 = _fold_conv_bn(params["w2"], params["b2"], params["bn2"], coutp, coutp)

    kernel = functools.partial(
        _pool_convblock_kernel, wp=wp, coutp=coutp, mblk=mblk,
        nblk1=nblk1, nblk2=nblk2, rows_hs=rows_hs)

    out_flat = pl.pallas_call(
        kernel,
        out_shape=jax.ShapeDtypeStruct((N, m2_pad, coutp), jnp.bfloat16),
        grid=(N,),
        in_specs=[
            pl.BlockSpec((None, rows_xs, 3 * cin), lambda n: (n, 0, 0)),   # xs
            pl.BlockSpec((3, 3 * cin, coutp), lambda n: (0, 0, 0)),        # w1 (resident)
            pl.BlockSpec((1, coutp), lambda n: (0, 0)),                    # shift1
            pl.BlockSpec((3, 3 * coutp, coutp), lambda n: (0, 0, 0)),      # w2 (resident)
            pl.BlockSpec((1, coutp), lambda n: (0, 0)),                    # shift2
        ],
        out_specs=pl.BlockSpec((None, m2_pad, coutp), lambda n: (n, 0, 0)),
        scratch_shapes=[
            pltpu.VMEM((rows_h, coutp), jnp.bfloat16),       # conv1 activation
            pltpu.VMEM((rows_hs, 3 * coutp), jnp.bfloat16),  # conv2 kw-slab
        ],
        compiler_params=pltpu.CompilerParams(
            dimension_semantics=("parallel",),
            vmem_limit_bytes=64 * 1024 * 1024,
        ),
    )(xs, w1m, s1, w2m, s2)

    # --- module boundary: crop junk rows/cols, strip channel pad, NHWC->NCHW ---
    out = out_flat[:, :m2, :cout].reshape(N, ho2, wp, cout)[:, :, :wo2, :]
    return jnp.transpose(out, (0, 3, 1, 2)).astype(jnp.float32)


# --------------------------- pure-JAX reference ---------------------------- #
def _ref_forward(params, x):
    N, C, H, W = x.shape
    hp, wp = H // 2, W // 2
    xe = x[:, :, :2 * hp, :2 * wp].reshape(N, C, hp, 2, wp, 2).max(axis=(3, 5))

    def conv_bn_gelu(y, w, b, bn):
        out = jax.lax.conv_general_dilated(
            y, w, window_strides=(1, 1), padding="VALID",
            dimension_numbers=("NCHW", "OIHW", "NCHW"))
        out = out + b[None, :, None, None]
        gamma, beta, mean, var = bn
        inv = gamma / jnp.sqrt(var + _BN_EPS)
        out = (out - mean[None, :, None, None]) * inv[None, :, None, None] \
              + beta[None, :, None, None]
        return jax.nn.gelu(out, approximate=False)

    h = conv_bn_gelu(xe, params["w1"], params["b1"], params["bn1"])
    return conv_bn_gelu(h, params["w2"], params["b2"], params["bn2"])


# -------------------------------- params ----------------------------------- #
def init_params(key, in_channels, out_channels):
    ks = jax.random.split(key, 10)
    f32 = jnp.float32

    def nrm(k, shape, s=0.1):
        return (s * jax.random.normal(k, shape)).astype(f32)

    return {
        # Conv2d(in_channels, out_channels, 3) + BatchNorm2d(out_channels)
        "w1": nrm(ks[0], (out_channels, in_channels, 3, 3)),
        "b1": nrm(ks[1], (out_channels,)),
        "bn1": (1.0 + nrm(ks[2], (out_channels,)),                       # gamma
                nrm(ks[3], (out_channels,)),                             # beta
                nrm(ks[4], (out_channels,)),                             # running_mean
                0.5 + jax.random.uniform(ks[5], (out_channels,), f32)),  # running_var
        # Conv2d(out_channels, out_channels, 3) + BatchNorm2d(out_channels)
        "w2": nrm(ks[6], (out_channels, out_channels, 3, 3)),
        "b2": nrm(ks[7], (out_channels,)),
        "bn2": (1.0 + nrm(ks[8], (out_channels,)),
                nrm(ks[9], (out_channels,)),
                jnp.zeros((out_channels,), f32),
                jnp.ones((out_channels,), f32)),
    }


if __name__ == "__main__":
    in_channels, out_channels = 4, 8
    key = jax.random.PRNGKey(0)
    kx, kp = jax.random.split(key)

    x = jax.random.normal(kx, (2, in_channels, 16, 16), jnp.float32)   # NCHW
    params = init_params(kp, in_channels, out_channels)

    out = jax.block_until_ready(jax.jit(downsample_forward)(params, x))

    # 16x16 -> maxpool 8x8 -> conv3x3 6x6 -> conv3x3 4x4
    assert out.shape == (2, out_channels, 4, 4), out.shape
    assert bool(jnp.all(jnp.isfinite(out)))

    ref = jax.block_until_ready(_ref_forward(params, x))
    max_err = float(jnp.max(jnp.abs(out - ref)))
    assert max_err < 1e-1, f"mismatch vs reference: {max_err}"

    print("KERNEL_OK")
</pallas_src>

<mosaic_0001>
module attributes {stable_mosaic.version = 11 : i64} {
  func.func @_pool_convblock_kernel(%arg0: i32, %arg1: memref<1x80x12xbf16, #tpu.memory_space<vmem>>, %arg2: memref<3x12x128xbf16, #tpu.memory_space<vmem>>, %arg3: memref<1x128xf32, #tpu.memory_space<vmem>>, %arg4: memref<3x384x128xbf16, #tpu.memory_space<vmem>>, %arg5: memref<1x128xf32, #tpu.memory_space<vmem>>, %arg6: memref<1x32x128xbf16, #tpu.memory_space<vmem>>, %arg7: memref<64x128xbf16, #tpu.memory_space<vmem>>, %arg8: memref<48x384xbf16, #tpu.memory_space<vmem>>) attributes {dimension_semantics = [#tpu.dimension_semantics<parallel>], iteration_bounds = array<i64: 2>, scalar_prefetch = 0 : i64, scratch_operands = 2 : i64, tpu.core_type = #tpu.core_type<tc>, window_params = [{transform_indices = @transform_0, window_bounds = array<i64: 1, 80, 12>}, {pipeline_mode = #tpu.pipeline_mode<synchronous>, transform_indices = @transform_1, window_bounds = array<i64: 3, 12, 128>}, {pipeline_mode = #tpu.pipeline_mode<synchronous>, transform_indices = @transform_2, window_bounds = array<i64: 1, 128>}, {pipeline_mode = #tpu.pipeline_mode<synchronous>, transform_indices = @transform_3, window_bounds = array<i64: 3, 384, 128>}, {pipeline_mode = #tpu.pipeline_mode<synchronous>, transform_indices = @transform_4, window_bounds = array<i64: 1, 128>}, {transform_indices = @transform_5, window_bounds = array<i64: 1, 32, 128>}]} {
    %c0_i32 = arith.constant 0 : i32
    %c32_i32 = arith.constant 32 : i32
    %0 = arith.muli %c0_i32, %c32_i32 : i32
    %1 = tpu.assume_multiple %0, 8 : i32
    %cst = arith.constant 0.000000e+00 : f32
    %2 = vector.broadcast %cst : f32 to vector<32x128xf32>
    %c0_i32_0 = arith.constant 0 : i32
    %3 = arith.addi %1, %c0_i32_0 : i32
    %c0 = arith.constant 0 : index
    %4 = arith.index_cast %3 : i32 to index
    %c0_1 = arith.constant 0 : index
    %5 = vector.load %arg1[%c0, %4, %c0_1] : memref<1x80x12xbf16, #tpu.memory_space<vmem>>, vector<1x32x12xbf16>
    %6 = vector.shape_cast %5 : vector<1x32x12xbf16> to vector<32x12xbf16>
    %c0_2 = arith.constant 0 : index
    %c0_3 = arith.constant 0 : index
    %c0_4 = arith.constant 0 : index
    %7 = vector.load %arg2[%c0_2, %c0_3, %c0_4] : memref<3x12x128xbf16, #tpu.memory_space<vmem>>, vector<1x12x128xbf16>
    %8 = vector.shape_cast %7 : vector<1x12x128xbf16> to vector<12x128xbf16>
    %cst_5 = arith.constant dense<0.000000e+00> : vector<32x128xf32>
    %9 = tpu.matmul %6, %8, %cst_5 {dimension_numbers = #tpu.dot_dimension_numbers<[1], [0], [0], [1], [0, 0, 1, 1], [], []>} : vector<32x12xbf16>, vector<12x128xbf16>, vector<32x128xf32> -> vector<32x128xf32>
    %10 = arith.addf %2, %9 : vector<32x128xf32>
    %c8_i32 = arith.constant 8 : i32
    %11 = arith.addi %1, %c8_i32 : i32
    %c0_6 = arith.constant 0 : index
    %12 = arith.index_cast %11 : i32 to index
    %c0_7 = arith.constant 0 : index
    %13 = vector.load %arg1[%c0_6, %12, %c0_7] : memref<1x80x12xbf16, #tpu.memory_space<vmem>>, vector<1x32x12xbf16>
    %14 = vector.shape_cast %13 : vector<1x32x12xbf16> to vector<32x12xbf16>
    %c1 = arith.constant 1 : index
    %c0_8 = arith.constant 0 : index
    %c0_9 = arith.constant 0 : index
    %15 = vector.load %arg2[%c1, %c0_8, %c0_9] : memref<3x12x128xbf16, #tpu.memory_space<vmem>>, vector<1x12x128xbf16>
    %16 = vector.shape_cast %15 : vector<1x12x128xbf16> to vector<12x128xbf16>
    %cst_10 = arith.constant dense<0.000000e+00> : vector<32x128xf32>
    %17 = tpu.matmul %14, %16, %cst_10 {dimension_numbers = #tpu.dot_dimension_numbers<[1], [0], [0], [1], [0, 0, 1, 1], [], []>} : vector<32x12xbf16>, vector<12x128xbf16>, vector<32x128xf32> -> vector<32x128xf32>
    %18 = arith.addf %10, %17 : vector<32x128xf32>
    %c16_i32 = arith.constant 16 : i32
    %19 = arith.addi %1, %c16_i32 : i32
    %c0_11 = arith.constant 0 : index
    %20 = arith.index_cast %19 : i32 to index
    %c0_12 = arith.constant 0 : index
    %21 = vector.load %arg1[%c0_11, %20, %c0_12] : memref<1x80x12xbf16, #tpu.memory_space<vmem>>, vector<1x32x12xbf16>
    %22 = vector.shape_cast %21 : vector<1x32x12xbf16> to vector<32x12xbf16>
    %c2 = arith.constant 2 : index
    %c0_13 = arith.constant 0 : index
    %c0_14 = arith.constant 0 : index
    %23 = vector.load %arg2[%c2, %c0_13, %c0_14] : memref<3x12x128xbf16, #tpu.memory_space<vmem>>, vector<1x12x128xbf16>
    %24 = vector.shape_cast %23 : vector<1x12x128xbf16> to vector<12x128xbf16>
    %cst_15 = arith.constant dense<0.000000e+00> : vector<32x128xf32>
    %25 = tpu.matmul %22, %24, %cst_15 {dimension_numbers = #tpu.dot_dimension_numbers<[1], [0], [0], [1], [0, 0, 1, 1], [], []>} : vector<32x12xbf16>, vector<12x128xbf16>, vector<32x128xf32> -> vector<32x128xf32>
    %26 = arith.addf %18, %25 : vector<32x128xf32>
    %c0_16 = arith.constant 0 : index
    %c0_17 = arith.constant 0 : index
    %27 = vector.load %arg3[%c0_16, %c0_17] : memref<1x128xf32, #tpu.memory_space<vmem>>, vector<1x128xf32>
    %28 = vector.broadcast %27 : vector<1x128xf32> to vector<32x128xf32>
    %29 = arith.addf %26, %28 : vector<32x128xf32>
    %30 = math.absf %29 : vector<32x128xf32>
    %cst_18 = arith.constant 0.707106769 : f32
    %31 = vector.broadcast %cst_18 : f32 to vector<32x128xf32>
    %32 = arith.mulf %30, %31 : vector<32x128xf32>
    %cst_19 = arith.constant 0.327591091 : f32
    %33 = vector.broadcast %cst_19 : f32 to vector<32x128xf32>
    %34 = arith.mulf %33, %32 : vector<32x128xf32>
    %cst_20 = arith.constant 1.000000e+00 : f32
    %35 = vector.broadcast %cst_20 : f32 to vector<32x128xf32>
    %36 = arith.addf %35, %34 : vector<32x128xf32>
    %37 = tpu.reciprocal %36 {approx = true} : vector<32x128xf32> -> vector<32x128xf32>
    %cst_21 = arith.constant 1.06140542 : f32
    %38 = vector.broadcast %cst_21 : f32 to vector<32x128xf32>
    %39 = arith.mulf %38, %37 : vector<32x128xf32>
    %cst_22 = arith.constant -1.45315206 : f32
    %40 = vector.broadcast %cst_22 : f32 to vector<32x128xf32>
    %41 = arith.addf %39, %40 : vector<32x128xf32>
    %42 = arith.mulf %41, %37 : vector<32x128xf32>
    %cst_23 = arith.constant 1.42141378 : f32
    %43 = vector.broadcast %cst_23 : f32 to vector<32x128xf32>
    %44 = arith.addf %42, %43 : vector<32x128xf32>
    %45 = arith.mulf %44, %37 : vector<32x128xf32>
    %cst_24 = arith.constant -0.284496725 : f32
    %46 = vector.broadcast %cst_24 : f32 to vector<32x128xf32>
    %47 = arith.addf %45, %46 : vector<32x128xf32>
    %48 = arith.mulf %47, %37 : vector<32x128xf32>
    %cst_25 = arith.constant 0.254829586 : f32
    %49 = vector.broadcast %cst_25 : f32 to vector<32x128xf32>
    %50 = arith.addf %48, %49 : vector<32x128xf32>
    %51 = arith.mulf %50, %37 : vector<32x128xf32>
    %cst_26 = arith.constant 0.000000e+00 : f32
    %52 = vector.broadcast %cst_26 : f32 to vector<32x128xf32>
    %53 = arith.subf %52, %32 : vector<32x128xf32>
    %54 = arith.mulf %53, %32 : vector<32x128xf32>
    %55 = math.exp %54 : vector<32x128xf32>
    %56 = arith.mulf %51, %55 : vector<32x128xf32>
    %cst_27 = arith.constant 1.000000e+00 : f32
    %57 = vector.broadcast %cst_27 : f32 to vector<32x128xf32>
    %58 = arith.subf %57, %56 : vector<32x128xf32>
    %cst_28 = arith.constant 0.000000e+00 : f32
    %59 = vector.broadcast %cst_28 : f32 to vector<32x128xf32>
    %60 = arith.cmpf oge, %29, %59 : vector<32x128xf32>
    %cst_29 = arith.constant 0.000000e+00 : f32
    %61 = vector.broadcast %cst_29 : f32 to vector<32x128xf32>
    %62 = arith.subf %61, %58 : vector<32x128xf32>
    %63 = arith.select %60, %58, %62 : vector<32x128xi1>, vector<32x128xf32>
    %cst_30 = arith.constant 5.000000e-01 : f32
    %64 = vector.broadcast %cst_30 : f32 to vector<32x128xf32>
    %65 = arith.mulf %64, %29 : vector<32x128xf32>
    %cst_31 = arith.constant 1.000000e+00 : f32
    %66 = vector.broadcast %cst_31 : f32 to vector<32x128xf32>
    %67 = arith.addf %66, %63 : vector<32x128xf32>
    %68 = arith.mulf %65, %67 : vector<32x128xf32>
    %69 = arith.truncf %68 : vector<32x128xf32> to vector<32x128xbf16>
    %70 = arith.index_cast %1 : i32 to index
    %c0_32 = arith.constant 0 : index
    %71 = vector.load %arg7[%70, %c0_32] : memref<64x128xbf16, #tpu.memory_space<vmem>>, vector<32x128xbf16>
    tpu.vector_store %arg7[%70, %c0_32], %69 {strides = array<i32>} : memref<64x128xbf16, #tpu.memory_space<vmem>>, vector<32x128xbf16>,
    %c1_i32 = arith.constant 1 : i32
    %c32_i32_33 = arith.constant 32 : i32
    %72 = arith.muli %c1_i32, %c32_i32_33 : i32
    %73 = tpu.assume_multiple %72, 8 : i32
    %cst_34 = arith.constant 0.000000e+00 : f32
    %74 = vector.broadcast %cst_34 : f32 to vector<32x128xf32>
    %c0_i32_35 = arith.constant 0 : i32
    %75 = arith.addi %73, %c0_i32_35 : i32
    %c0_36 = arith.constant 0 : index
    %76 = arith.index_cast %75 : i32 to index
    %c0_37 = arith.constant 0 : index
    %77 = vector.load %arg1[%c0_36, %76, %c0_37] : memref<1x80x12xbf16, #tpu.memory_space<vmem>>, vector<1x32x12xbf16>
    %78 = vector.shape_cast %77 : vector<1x32x12xbf16> to vector<32x12xbf16>
    %c0_38 = arith.constant 0 : index
    %c0_39 = arith.constant 0 : index
    %c0_40 = arith.constant 0 : index
    %79 = vector.load %arg2[%c0_38, %c0_39, %c0_40] : memref<3x12x128xbf16, #tpu.memory_space<vmem>>, vector<1x12x128xbf16>
    %80 = vector.shape_cast %79 : vector<1x12x128xbf16> to vector<12x128xbf16>
    %cst_41 = arith.constant dense<0.000000e+00> : vector<32x128xf32>
    %81 = tpu.matmul %78, %80, %cst_41 {dimension_numbers = #tpu.dot_dimension_numbers<[1], [0], [0], [1], [0, 0, 1, 1], [], []>} : vector<32x12xbf16>, vector<12x128xbf16>, vector<32x128xf32> -> vector<32x128xf32>
    %82 = arith.addf %74, %81 : vector<32x128xf32>
    %c8_i32_42 = arith.constant 8 : i32
    %83 = arith.addi %73, %c8_i32_42 : i32
    %c0_43 = arith.constant 0 : index
    %84 = arith.index_cast %83 : i32 to index
    %c0_44 = arith.constant 0 : index
    %85 = vector.load %arg1[%c0_43, %84, %c0_44] : memref<1x80x12xbf16, #tpu.memory_space<vmem>>, vector<1x32x12xbf16>
    %86 = vector.shape_cast %85 : vector<1x32x12xbf16> to vector<32x12xbf16>
    %c1_45 = arith.constant 1 : index
    %c0_46 = arith.constant 0 : index
    %c0_47 = arith.constant 0 : index
    %87 = vector.load %arg2[%c1_45, %c0_46, %c0_47] : memref<3x12x128xbf16, #tpu.memory_space<vmem>>, vector<1x12x128xbf16>
    %88 = vector.shape_cast %87 : vector<1x12x128xbf16> to vector<12x128xbf16>
    %cst_48 = arith.constant dense<0.000000e+00> : vector<32x128xf32>
    %89 = tpu.matmul %86, %88, %cst_48 {dimension_numbers = #tpu.dot_dimension_numbers<[1], [0], [0], [1], [0, 0, 1, 1], [], []>} : vector<32x12xbf16>, vector<12x128xbf16>, vector<32x128xf32> -> vector<32x128xf32>
    %90 = arith.addf %82, %89 : vector<32x128xf32>
    %c16_i32_49 = arith.constant 16 : i32
    %91 = arith.addi %73, %c16_i32_49 : i32
    %c0_50 = arith.constant 0 : index
    %92 = arith.index_cast %91 : i32 to index
    %c0_51 = arith.constant 0 : index
    %93 = vector.load %arg1[%c0_50, %92, %c0_51] : memref<1x80x12xbf16, #tpu.memory_space<vmem>>, vector<1x32x12xbf16>
    %94 = vector.shape_cast %93 : vector<1x32x12xbf16> to vector<32x12xbf16>
    %c2_52 = arith.constant 2 : index
    %c0_53 = arith.constant 0 : index
    %c0_54 = arith.constant 0 : index
    %95 = vector.load %arg2[%c2_52, %c0_53, %c0_54] : memref<3x12x128xbf16, #tpu.memory_space<vmem>>, vector<1x12x128xbf16>
    %96 = vector.shape_cast %95 : vector<1x12x128xbf16> to vector<12x128xbf16>
    %cst_55 = arith.constant dense<0.000000e+00> : vector<32x128xf32>
    %97 = tpu.matmul %94, %96, %cst_55 {dimension_numbers = #tpu.dot_dimension_numbers<[1], [0], [0], [1], [0, 0, 1, 1], [], []>} : vector<32x12xbf16>, vector<12x128xbf16>, vector<32x128xf32> -> vector<32x128xf32>
    %98 = arith.addf %90, %97 : vector<32x128xf32>
    %c0_56 = arith.constant 0 : index
    %c0_57 = arith.constant 0 : index
    %99 = vector.load %arg3[%c0_56, %c0_57] : memref<1x128xf32, #tpu.memory_space<vmem>>, vector<1x128xf32>
    %100 = vector.broadcast %99 : vector<1x128xf32> to vector<32x128xf32>
    %101 = arith.addf %98, %100 : vector<32x128xf32>
    %102 = math.absf %101 : vector<32x128xf32>
    %cst_58 = arith.constant 0.707106769 : f32
    %103 = vector.broadcast %cst_58 : f32 to vector<32x128xf32>
    %104 = arith.mulf %102, %103 : vector<32x128xf32>
    %cst_59 = arith.constant 0.327591091 : f32
    %105 = vector.broadcast %cst_59 : f32 to vector<32x128xf32>
    %106 = arith.mulf %105, %104 : vector<32x128xf32>
    %cst_60 = arith.constant 1.000000e+00 : f32
    %107 = vector.broadcast %cst_60 : f32 to vector<32x128xf32>
    %108 = arith.addf %107, %106 : vector<32x128xf32>
    %109 = tpu.reciprocal %108 {approx = true} : vector<32x128xf32> -> vector<32x128xf32>
    %cst_61 = arith.constant 1.06140542 : f32
    %110 = vector.broadcast %cst_61 : f32 to vector<32x128xf32>
    %111 = arith.mulf %110, %109 : vector<32x128xf32>
    %cst_62 = arith.constant -1.45315206 : f32
    %112 = vector.broadcast %cst_62 : f32 to vector<32x128xf32>
    %113 = arith.addf %111, %112 : vector<32x128xf32>
    %114 = arith.mulf %113, %109 : vector<32x128xf32>
    %cst_63 = arith.constant 1.42141378 : f32
    %115 = vector.broadcast %cst_63 : f32 to vector<32x128xf32>
    %116 = arith.addf %114, %115 : vector<32x128xf32>
    %117 = arith.mulf %116, %109 : vector<32x128xf32>
    %cst_64 = arith.constant -0.284496725 : f32
    %118 = vector.broadcast %cst_64 : f32 to vector<32x128xf32>
    %119 = arith.addf %117, %118 : vector<32x128xf32>
    %120 = arith.mulf %119, %109 : vector<32x128xf32>
    %cst_65 = arith.constant 0.254829586 : f32
    %121 = vector.broadcast %cst_65 : f32 to vector<32x128xf32>
    %122 = arith.addf %120, %121 : vector<32x128xf32>
    %123 = arith.mulf %122, %109 : vector<32x128xf32>
    %cst_66 = arith.constant 0.000000e+00 : f32
    %124 = vector.broadcast %cst_66 : f32 to vector<32x128xf32>
    %125 = arith.subf %124, %104 : vector<32x128xf32>
    %126 = arith.mulf %125, %104 : vector<32x128xf32>
    %127 = math.exp %126 : vector<32x128xf32>
    %128 = arith.mulf %123, %127 : vector<32x128xf32>
    %cst_67 = arith.constant 1.000000e+00 : f32
    %129 = vector.broadcast %cst_67 : f32 to vector<32x128xf32>
    %130 = arith.subf %129, %128 : vector<32x128xf32>
    %cst_68 = arith.constant 0.000000e+00 : f32
    %131 = vector.broadcast %cst_68 : f32 to vector<32x128xf32>
    %132 = arith.cmpf oge, %101, %131 : vector<32x128xf32>
    %cst_69 = arith.constant 0.000000e+00 : f32
    %133 = vector.broadcast %cst_69 : f32 to vector<32x128xf32>
    %134 = arith.subf %133, %130 : vector<32x128xf32>
    %135 = arith.select %132, %130, %134 : vector<32x128xi1>, vector<32x128xf32>
    %cst_70 = arith.constant 5.000000e-01 : f32
    %136 = vector.broadcast %cst_70 : f32 to vector<32x128xf32>
    %137 = arith.mulf %136, %101 : vector<32x128xf32>
    %cst_71 = arith.constant 1.000000e+00 : f32
    %138 = vector.broadcast %cst_71 : f32 to vector<32x128xf32>
    %139 = arith.addf %138, %135 : vector<32x128xf32>
    %140 = arith.mulf %137, %139 : vector<32x128xf32>
    %141 = arith.truncf %140 : vector<32x128xf32> to vector<32x128xbf16>
    %142 = arith.index_cast %73 : i32 to index
    %c0_72 = arith.constant 0 : index
    %143 = vector.load %arg7[%142, %c0_72] : memref<64x128xbf16, #tpu.memory_space<vmem>>, vector<32x128xbf16>
    tpu.vector_store %arg7[%142, %c0_72], %141 {strides = array<i32>} : memref<64x128xbf16, #tpu.memory_space<vmem>>, vector<32x128xbf16>,
    %c2_i32 = arith.constant 2 : i32
    %c0_73 = arith.constant 0 : index
    %c0_74 = arith.constant 0 : index
    %144 = vector.load %arg7[%c0_73, %c0_74] : memref<64x128xbf16, #tpu.memory_space<vmem>>, vector<48x128xbf16>
    %c0_75 = arith.constant 0 : index
    %c0_76 = arith.constant 0 : index
    %145 = vector.load %arg8[%c0_75, %c0_76] : memref<48x384xbf16, #tpu.memory_space<vmem>>, vector<48x128xbf16>
    tpu.vector_store %arg8[%c0_75, %c0_76], %144 {strides = array<i32>} : memref<48x384xbf16, #tpu.memory_space<vmem>>, vector<48x128xbf16>,
    %c1_77 = arith.constant 1 : index
    %c0_78 = arith.constant 0 : index
    %146 = vector.load %arg7[%c1_77, %c0_78] : memref<64x128xbf16, #tpu.memory_space<vmem>>, vector<48x128xbf16>
    %c0_79 = arith.constant 0 : index
    %c128 = arith.constant 128 : index
    %147 = vector.load %arg8[%c0_79, %c128] : memref<48x384xbf16, #tpu.memory_space<vmem>>, vector<48x128xbf16>
    tpu.vector_store %arg8[%c0_79, %c128], %146 {strides = array<i32>} : memref<48x384xbf16, #tpu.memory_space<vmem>>, vector<48x128xbf16>,
    %c2_80 = arith.constant 2 : index
    %c0_81 = arith.constant 0 : index
    %148 = vector.load %arg7[%c2_80, %c0_81] : memref<64x128xbf16, #tpu.memory_space<vmem>>, vector<48x128xbf16>
    %c0_82 = arith.constant 0 : index
    %c256 = arith.constant 256 : index
    %149 = vector.load %arg8[%c0_82, %c256] : memref<48x384xbf16, #tpu.memory_space<vmem>>, vector<48x128xbf16>
    tpu.vector_store %arg8[%c0_82, %c256], %148 {strides = array<i32>} : memref<48x384xbf16, #tpu.memory_space<vmem>>, vector<48x128xbf16>,
    %c0_i32_83 = arith.constant 0 : i32
    %c32_i32_84 = arith.constant 32 : i32
    %150 = arith.muli %c0_i32_83, %c32_i32_84 : i32
    %151 = tpu.assume_multiple %150, 8 : i32
    %cst_85 = arith.constant 0.000000e+00 : f32
    %152 = vector.broadcast %cst_85 : f32 to vector<32x128xf32>
    %c0_i32_86 = arith.constant 0 : i32
    %153 = arith.addi %151, %c0_i32_86 : i32
    %154 = arith.index_cast %153 : i32 to index
    %c0_87 = arith.constant 0 : index
    %155 = vector.load %arg8[%154, %c0_87] : memref<48x384xbf16, #tpu.memory_space<vmem>>, vector<32x384xbf16>
    %c0_88 = arith.constant 0 : index
    %c0_89 = arith.constant 0 : index
    %c0_90 = arith.constant 0 : index
    %156 = vector.load %arg4[%c0_88, %c0_89, %c0_90] : memref<3x384x128xbf16, #tpu.memory_space<vmem>>, vector<1x384x128xbf16>
    %157 = vector.shape_cast %156 : vector<1x384x128xbf16> to vector<384x128xbf16>
    %cst_91 = arith.constant dense<0.000000e+00> : vector<32x128xf32>
    %158 = tpu.matmul %155, %157, %cst_91 {dimension_numbers = #tpu.dot_dimension_numbers<[1], [0], [0], [1], [0, 0, 1, 1], [], []>} : vector<32x384xbf16>, vector<384x128xbf16>, vector<32x128xf32> -> vector<32x128xf32>
    %159 = arith.addf %152, %158 : vector<32x128xf32>
    %c8_i32_92 = arith.constant 8 : i32
    %160 = arith.addi %151, %c8_i32_92 : i32
    %161 = arith.index_cast %160 : i32 to index
    %c0_93 = arith.constant 0 : index
    %162 = vector.load %arg8[%161, %c0_93] : memref<48x384xbf16, #tpu.memory_space<vmem>>, vector<32x384xbf16>
    %c1_94 = arith.constant 1 : index
    %c0_95 = arith.constant 0 : index
    %c0_96 = arith.constant 0 : index
    %163 = vector.load %arg4[%c1_94, %c0_95, %c0_96] : memref<3x384x128xbf16, #tpu.memory_space<vmem>>, vector<1x384x128xbf16>
    %164 = vector.shape_cast %163 : vector<1x384x128xbf16> to vector<384x128xbf16>
    %cst_97 = arith.constant dense<0.000000e+00> : vector<32x128xf32>
    %165 = tpu.matmul %162, %164, %cst_97 {dimension_numbers = #tpu.dot_dimension_numbers<[1], [0], [0], [1], [0, 0, 1, 1], [], []>} : vector<32x384xbf16>, vector<384x128xbf16>, vector<32x128xf32> -> vector<32x128xf32>
    %166 = arith.addf %159, %165 : vector<32x128xf32>
    %c16_i32_98 = arith.constant 16 : i32
    %167 = arith.addi %151, %c16_i32_98 : i32
    %168 = arith.index_cast %167 : i32 to index
    %c0_99 = arith.constant 0 : index
    %169 = vector.load %arg8[%168, %c0_99] : memref<48x384xbf16, #tpu.memory_space<vmem>>, vector<32x384xbf16>
    %c2_100 = arith.constant 2 : index
    %c0_101 = arith.constant 0 : index
    %c0_102 = arith.constant 0 : index
    %170 = vector.load %arg4[%c2_100, %c0_101, %c0_102] : memref<3x384x128xbf16, #tpu.memory_space<vmem>>, vector<1x384x128xbf16>
    %171 = vector.shape_cast %170 : vector<1x384x128xbf16> to vector<384x128xbf16>
    %cst_103 = arith.constant dense<0.000000e+00> : vector<32x128xf32>
    %172 = tpu.matmul %169, %171, %cst_103 {dimension_numbers = #tpu.dot_dimension_numbers<[1], [0], [0], [1], [0, 0, 1, 1], [], []>} : vector<32x384xbf16>, vector<384x128xbf16>, vector<32x128xf32> -> vector<32x128xf32>
    %173 = arith.addf %166, %172 : vector<32x128xf32>
    %c0_104 = arith.constant 0 : index
    %c0_105 = arith.constant 0 : index
    %174 = vector.load %arg5[%c0_104, %c0_105] : memref<1x128xf32, #tpu.memory_space<vmem>>, vector<1x128xf32>
    %175 = vector.broadcast %174 : vector<1x128xf32> to vector<32x128xf32>
    %176 = arith.addf %173, %175 : vector<32x128xf32>
    %177 = math.absf %176 : vector<32x128xf32>
    %cst_106 = arith.constant 0.707106769 : f32
    %178 = vector.broadcast %cst_106 : f32 to vector<32x128xf32>
    %179 = arith.mulf %177, %178 : vector<32x128xf32>
    %cst_107 = arith.constant 0.327591091 : f32
    %180 = vector.broadcast %cst_107 : f32 to vector<32x128xf32>
    %181 = arith.mulf %180, %179 : vector<32x128xf32>
    %cst_108 = arith.constant 1.000000e+00 : f32
    %182 = vector.broadcast %cst_108 : f32 to vector<32x128xf32>
    %183 = arith.addf %182, %181 : vector<32x128xf32>
    %184 = tpu.reciprocal %183 {approx = true} : vector<32x128xf32> -> vector<32x128xf32>
    %cst_109 = arith.constant 1.06140542 : f32
    %185 = vector.broadcast %cst_109 : f32 to vector<32x128xf32>
    %186 = arith.mulf %185, %184 : vector<32x128xf32>
    %cst_110 = arith.constant -1.45315206 : f32
    %187 = vector.broadcast %cst_110 : f32 to vector<32x128xf32>
    %188 = arith.addf %186, %187 : vector<32x128xf32>
    %189 = arith.mulf %188, %184 : vector<32x128xf32>
    %cst_111 = arith.constant 1.42141378 : f32
    %190 = vector.broadcast %cst_111 : f32 to vector<32x128xf32>
    %191 = arith.addf %189, %190 : vector<32x128xf32>
    %192 = arith.mulf %191, %184 : vector<32x128xf32>
    %cst_112 = arith.constant -0.284496725 : f32
    %193 = vector.broadcast %cst_112 : f32 to vector<32x128xf32>
    %194 = arith.addf %192, %193 : vector<32x128xf32>
    %195 = arith.mulf %194, %184 : vector<32x128xf32>
    %cst_113 = arith.constant 0.254829586 : f32
    %196 = vector.broadcast %cst_113 : f32 to vector<32x128xf32>
    %197 = arith.addf %195, %196 : vector<32x128xf32>
    %198 = arith.mulf %197, %184 : vector<32x128xf32>
    %cst_114 = arith.constant 0.000000e+00 : f32
    %199 = vector.broadcast %cst_114 : f32 to vector<32x128xf32>
    %200 = arith.subf %199, %179 : vector<32x128xf32>
    %201 = arith.mulf %200, %179 : vector<32x128xf32>
    %202 = math.exp %201 : vector<32x128xf32>
    %203 = arith.mulf %198, %202 : vector<32x128xf32>
    %cst_115 = arith.constant 1.000000e+00 : f32
    %204 = vector.broadcast %cst_115 : f32 to vector<32x128xf32>
    %205 = arith.subf %204, %203 : vector<32x128xf32>
    %cst_116 = arith.constant 0.000000e+00 : f32
    %206 = vector.broadcast %cst_116 : f32 to vector<32x128xf32>
    %207 = arith.cmpf oge, %176, %206 : vector<32x128xf32>
    %cst_117 = arith.constant 0.000000e+00 : f32
    %208 = vector.broadcast %cst_117 : f32 to vector<32x128xf32>
    %209 = arith.subf %208, %205 : vector<32x128xf32>
    %210 = arith.select %207, %205, %209 : vector<32x128xi1>, vector<32x128xf32>
    %cst_118 = arith.constant 5.000000e-01 : f32
    %211 = vector.broadcast %cst_118 : f32 to vector<32x128xf32>
    %212 = arith.mulf %211, %176 : vector<32x128xf32>
    %cst_119 = arith.constant 1.000000e+00 : f32
    %213 = vector.broadcast %cst_119 : f32 to vector<32x128xf32>
    %214 = arith.addf %213, %210 : vector<32x128xf32>
    %215 = arith.mulf %212, %214 : vector<32x128xf32>
    %216 = arith.truncf %215 : vector<32x128xf32> to vector<32x128xbf16>
    %c0_120 = arith.constant 0 : index
    %217 = arith.index_cast %151 : i32 to index
    %c0_121 = arith.constant 0 : index
    %218 = vector.load %arg6[%c0_120, %217, %c0_121] : memref<1x32x128xbf16, #tpu.memory_space<vmem>>, vector<1x32x128xbf16>
    %219 = vector.shape_cast %218 : vector<1x32x128xbf16> to vector<32x128xbf16>
    %220 = vector.shape_cast %216 : vector<32x128xbf16> to vector<1x32x128xbf16>
    tpu.vector_store %arg6[%c0_120, %217, %c0_121], %220 {strides = array<i32>} : memref<1x32x128xbf16, #tpu.memory_space<vmem>>, vector<1x32x128xbf16>,
    %c1_i32_122 = arith.constant 1 : i32
    return
  }
  func.func @transform_0(%arg0: i32) -> (i32, i32, i32) {
    %c0_i32 = arith.constant 0 : i32
    %c0_i32_0 = arith.constant 0 : i32
    %c0_i32_1 = arith.constant 0 : i32
    return %arg0, %c0_i32, %c0_i32_0 : i32, i32, i32
  }
  func.func @transform_1(%arg0: i32) -> (i32, i32, i32) {
    %c0_i32 = arith.constant 0 : i32
    %c0_i32_0 = arith.constant 0 : i32
    %c0_i32_1 = arith.constant 0 : i32
    %c0_i32_2 = arith.constant 0 : i32
    return %c0_i32, %c0_i32_0, %c0_i32_1 : i32, i32, i32
  }
  func.func @transform_2(%arg0: i32) -> (i32, i32) {
    %c0_i32 = arith.constant 0 : i32
    %c0_i32_0 = arith.constant 0 : i32
    %c0_i32_1 = arith.constant 0 : i32
    return %c0_i32, %c0_i32_0 : i32, i32
  }
  func.func @transform_3(%arg0: i32) -> (i32, i32, i32) {
    %c0_i32 = arith.constant 0 : i32
    %c0_i32_0 = arith.constant 0 : i32
    %c0_i32_1 = arith.constant 0 : i32
    %c0_i32_2 = arith.constant 0 : i32
    return %c0_i32, %c0_i32_0, %c0_i32_1 : i32, i32, i32
  }
  func.func @transform_4(%arg0: i32) -> (i32, i32) {
    %c0_i32 = arith.constant 0 : i32
    %c0_i32_0 = arith.constant 0 : i32
    %c0_i32_1 = arith.constant 0 : i32
    return %c0_i32, %c0_i32_0 : i32, i32
  }
  func.func @transform_5(%arg0: i32) -> (i32, i32, i32) {
    %c0_i32 = arith.constant 0 : i32
    %c0_i32_0 = arith.constant 0 : i32
    %c0_i32_1 = arith.constant 0 : i32
    return %arg0, %c0_i32, %c0_i32_0 : i32, i32, i32
  }
}

</mosaic_0001>

<llo_original>
// kernel: downsample_forward.1
$region0: #{downsample_forward.1}
  #allocation0 [shape = 'u32[]', space=smem, size = 0x4, offset = 0x4, fixed_abs, tag = 'smem constant byte address 0x4 - core index']
  #allocation1 [shape = 'u32[144,128]{1,0:T(1,128)}', space=vmem, size = 0x12000, scoped, tag = 'internal scratch']
  #allocation2 [shape = 'bf16[64,128]{1,0:T(8,128)(2,1)}', space=vmem, size = 0x4000, scoped, tag = 'scratch operand']
  #allocation3 [shape = 'bf16[48,384]{1,0:T(8,128)(2,1)}', space=vmem, size = 0x9000, scoped, tag = 'scratch operand']
  %s0 = inlined_call_operand.vmem [shape: bf16[2,80,12], index: 0, kind: input, shape index: {}]
  %s1 = inlined_call_operand.vmem [shape: bf16[3,12,128], index: 1, kind: input, shape index: {}]
  %s2 = inlined_call_operand.vmem [shape: f32[1,128], index: 2, kind: input, shape index: {}]
  %s3 = inlined_call_operand.vmem [shape: bf16[3,384,128], index: 3, kind: input, shape index: {}]
  %s4 = inlined_call_operand.vmem [shape: f32[1,128], index: 4, kind: input, shape index: {}]
  %s5 = inlined_call_operand.vmem [shape: bf16[2,32,128], index: 5, kind: output, shape index: {}]
  %s6 = sld [smem:[#allocation0]]
  $region53: #{downsample_forward.1} parent=0
    _
  %s8 = ssub.s32 1, %s6
  %s9 = scalar_select 0, %s8, %s6
  loop: start=0, step=1, limit=4
  $region2: #{downsample_forward.1} parent=0 // loop_pre_header
    _
  $region3: #{downsample_forward.1} parent=0 // loop_header
    %s11 = sphi 0, %s15
    %p12 = scmp.ge.s32.totalorder %s11, 4
    %s21 = sphi 0, %s23
    %s24 = sphi 0, %s21
    %s25 = sphi 0, %s24
    %s41 = sphi 0, %s25
    %s45 = sphi 0, %s45
    %s47 = sphi 0, %s45
    %s48 = sphi 0, %s47
    %s62 = sphi 0, %s48
    %s66 = sphi 0, %s66
    %s68 = sphi 0, %s66
    %s69 = sphi 0, %s68
    %s83 = sphi 0, %s69
    %s87 = sphi 0, %s87
    %s89 = sphi 0, %s87
    %s90 = sphi 0, %s89
    %s104 = sphi 0, %s90
    %s108 = sphi 0, %s108
    %s110 = sphi 0, %s108
    %s111 = sphi 0, %s110
    %s125 = sphi 0, %s111
    %s131 = sphi 0, %s133
    %s134 = sphi 0, %s131
    %s135 = sphi 0, %s134
    %s151 = sphi 0, %s135
  $region4: #{downsample_forward.1} parent=0 // loop_header_branch
    %14 = sbr.rel (%p12) target = $region8
  $region5: #{downsample_forward.1} parent=0 // loop_body
    %s16 = ssub.s32 %s11, 1
    %s17 = ssub.s32 %s11, 2
    %s18 = sadd.s32 %s11, 1
    %s19 = ssub.s32 %s11, %s18
    %p20 = scmp.eq.s32.totalorder %s19, 0
    %s22 = sadd.s32 %s21, 1
    %s23 = scalar_select %p20, %s21, %s22
    %p26 = pneg %p20
    %p27 = scmp.eq.s32.totalorder %s11, 1
    %p28 = por %p26, %p27
    %p29 = scmp.ne.s32.totalorder %s21, %s24
    %p30 = scmp.eq.s32.totalorder %s11, 0
    %p31 = por %p29, %p30
    %p32 = scmp.ne.s32.totalorder %s21, %s24
    %p33 = scmp.eq.s32.totalorder %s16, 1
    %p34 = por %p32, %p33
    %p35 = scmp.ne.s32.totalorder %s24, %s25
    %p36 = scmp.eq.s32.totalorder %s16, 0
    %p37 = por %p35, %p36
    %p38 = scmp.ne.s32.totalorder %s24, %s25
    %p39 = scmp.eq.s32.totalorder %s17, 1
    %p40 = por %p38, %p39
    %p42 = scmp.ne.s32.totalorder %s25, %s41
    %p43 = scmp.eq.s32.totalorder %s17, 0
    %p44 = por %p42, %p43
    %s46 = sadd.s32 %s45, 1
    %p49 = scmp.eq.s32.totalorder %s11, 1
    %p50 = scmp.ne.s32.totalorder %s45, %s47
    %p51 = scmp.eq.s32.totalorder %s11, 0
    %p52 = por %p50, %p51
    %p53 = scmp.ne.s32.totalorder %s45, %s47
    %p54 = scmp.eq.s32.totalorder %s16, 1
    %p55 = por %p53, %p54
    %p56 = scmp.ne.s32.totalorder %s47, %s48
    %p57 = scmp.eq.s32.totalorder %s16, 0
    %p58 = por %p56, %p57
    %p59 = scmp.ne.s32.totalorder %s47, %s48
    %p60 = scmp.eq.s32.totalorder %s17, 1
    %p61 = por %p59, %p60
    %p63 = scmp.ne.s32.totalorder %s48, %s62
    %p64 = scmp.eq.s32.totalorder %s17, 0
    %p65 = por %p63, %p64
    %s67 = sadd.s32 %s66, 1
    %p70 = scmp.eq.s32.totalorder %s11, 1
    %p71 = scmp.ne.s32.totalorder %s66, %s68
    %p72 = scmp.eq.s32.totalorder %s11, 0
    %p73 = por %p71, %p72
    %p74 = scmp.ne.s32.totalorder %s66, %s68
    %p75 = scmp.eq.s32.totalorder %s16, 1
    %p76 = por %p74, %p75
    %p77 = scmp.ne.s32.totalorder %s68, %s69
    %p78 = scmp.eq.s32.totalorder %s16, 0
    %p79 = por %p77, %p78
    %p80 = scmp.ne.s32.totalorder %s68, %s69
    %p81 = scmp.eq.s32.totalorder %s17, 1
    %p82 = por %p80, %p81
    %p84 = scmp.ne.s32.totalorder %s69, %s83
    %p85 = scmp.eq.s32.totalorder %s17, 0
    %p86 = por %p84, %p85
    %s88 = sadd.s32 %s87, 1
    %p91 = scmp.eq.s32.totalorder %s11, 1
    %p92 = scmp.ne.s32.totalorder %s87, %s89
    %p93 = scmp.eq.s32.totalorder %s11, 0
    %p94 = por %p92, %p93
    %p95 = scmp.ne.s32.totalorder %s87, %s89
    %p96 = scmp.eq.s32.totalorder %s16, 1
    %p97 = por %p95, %p96
    %p98 = scmp.ne.s32.totalorder %s89, %s90
    %p99 = scmp.eq.s32.totalorder %s16, 0
    %p100 = por %p98, %p99
    %p101 = scmp.ne.s32.totalorder %s89, %s90
    %p102 = scmp.eq.s32.totalorder %s17, 1
    %p103 = por %p101, %p102
    %p105 = scmp.ne.s32.totalorder %s90, %s104
    %p106 = scmp.eq.s32.totalorder %s17, 0
    %p107 = por %p105, %p106
    %s109 = sadd.s32 %s108, 1
    %p112 = scmp.eq.s32.totalorder %s11, 1
    %p113 = scmp.ne.s32.totalorder %s108, %s110
    %p114 = scmp.eq.s32.totalorder %s11, 0
    %p115 = por %p113, %p114
    %p116 = scmp.ne.s32.totalorder %s108, %s110
    %p117 = scmp.eq.s32.totalorder %s16, 1
    %p118 = por %p116, %p117
    %p119 = scmp.ne.s32.totalorder %s110, %s111
    %p120 = scmp.eq.s32.totalorder %s16, 0
    %p121 = por %p119, %p120
    %p122 = scmp.ne.s32.totalorder %s110, %s111
    %p123 = scmp.eq.s32.totalorder %s17, 1
    %p124 = por %p122, %p123
    %p126 = scmp.ne.s32.totalorder %s111, %s125
    %p127 = scmp.eq.s32.totalorder %s17, 0
    %p128 = por %p126, %p127
    %s129 = ssub.s32 %s11, %s18
    %p130 = scmp.eq.s32.totalorder %s129, 0
    %s132 = sadd.s32 %s131, 1
    %s133 = scalar_select %p130, %s131, %s132
    %p136 = pneg %p130
    %p137 = scmp.eq.s32.totalorder %s11, 1
    %p138 = por %p136, %p137
    %p139 = scmp.ne.s32.totalorder %s131, %s134
    %p140 = scmp.eq.s32.totalorder %s11, 0
    %p141 = por %p139, %p140
    %p142 = scmp.ne.s32.totalorder %s131, %s134
    %p143 = scmp.eq.s32.totalorder %s16, 1
    %p144 = por %p142, %p143
    %p145 = scmp.ne.s32.totalorder %s134, %s135
    %p146 = scmp.eq.s32.totalorder %s16, 0
    %p147 = por %p145, %p146
    %p148 = scmp.ne.s32.totalorder %s134, %s135
    %p149 = scmp.eq.s32.totalorder %s17, 1
    %p150 = por %p148, %p149
    %p152 = scmp.ne.s32.totalorder %s135, %s151
    %p153 = scmp.eq.s32.totalorder %s17, 0
    %p154 = por %p152, %p153
    %p155 = scmp.le.s32.totalorder 1, %s11
    %p156 = scmp.lt.s32.totalorder %s11, 3
    %p157 = pnand %p155, %p156
    %p158 = pneg %p157
    // Predicated region
    $region9: #{downsample_forward.1} parent=5 // pred_check
      _
    $region10: #{downsample_forward.1} parent=5 // pred_check_branch
      %160 = sbr.rel (%p157) target = $region12
    $region11: #{downsample_forward.1} parent=5 // pred_region
      %s161 = ssub.s32 %s11, 1
      // Predicated region
      $region13: #{downsample_forward.1} parent=11 // pred_check
        %p162 = pneg %p58
      $region14: #{downsample_forward.1} parent=11 // pred_check_branch
        %164 = sbr.rel (%p162) target = $region16
      $region15: #{downsample_forward.1} parent=11 // pred_region
        _
      $region16: #{downsample_forward.1} parent=11 // pred_fallthru
        _
      // Predicated region
      $region17: #{downsample_forward.1} parent=11 // pred_check
        %p165 = pneg %p79
      $region18: #{downsample_forward.1} parent=11 // pred_check_branch
        %167 = sbr.rel (%p165) target = $region20
      $region19: #{downsample_forward.1} parent=11 // pred_region
        _
      $region20: #{downsample_forward.1} parent=11 // pred_fallthru
        _
      // Predicated region
      $region21: #{downsample_forward.1} parent=11 // pred_check
        %p168 = pneg %p100
      $region22: #{downsample_forward.1} parent=11 // pred_check_branch
        %170 = sbr.rel (%p168) target = $region24
      $region23: #{downsample_forward.1} parent=11 // pred_region
        _
      $region24: #{downsample_forward.1} parent=11 // pred_fallthru
        _
      // Predicated region
      $region25: #{downsample_forward.1} parent=11 // pred_check
        %p171 = pneg %p121
      $region26: #{downsample_forward.1} parent=11 // pred_check_branch
        %173 = sbr.rel (%p171) target = $region28
      $region27: #{downsample_forward.1} parent=11 // pred_region
        _
      $region28: #{downsample_forward.1} parent=11 // pred_fallthru
        _
    $region12: #{downsample_forward.1} parent=5 // pred_fallthru
      _
    %p174 = scmp.lt.s32.totalorder %s11, 2
    // Predicated region
    $region29: #{downsample_forward.1} parent=5 // pred_check
      %p175 = pneg %p174
    $region30: #{downsample_forward.1} parent=5 // pred_check_branch
      %177 = sbr.rel (%p175) target = $region32
    $region31: #{downsample_forward.1} parent=5 // pred_region
      // Predicated region
      $region33: #{downsample_forward.1} parent=31 // pred_check
        %p178 = pneg %p31
      $region34: #{downsample_forward.1} parent=31 // pred_check_branch
        %180 = sbr.rel (%p178) target = $region36
      $region35: #{downsample_forward.1} parent=31 // pred_region
        %p181 = scmp.lt.s32.totalorder %s11, 1
        %s182 = scalar_select %p181, %s11, 1
        %s183 = smul.addr %s182, 10
        %s184 = smul.addr %s183, 4
        %s185 = scalar_lea.vmem %s0, %s184
      $region36: #{downsample_forward.1} parent=31 // pred_fallthru
        _
    $region32: #{downsample_forward.1} parent=5 // pred_fallthru
      _
    %p186 = scmp.le.s32.totalorder 1, %s11
    %p187 = scmp.lt.s32.totalorder %s11, 3
    %p188 = pnand %p186, %p187
    %p189 = pneg %p188
    // Predicated region
    $region37: #{downsample_forward.1} parent=5 // pred_check
      _
    $region38: #{downsample_forward.1} parent=5 // pred_check_branch
      %191 = sbr.rel (%p188) target = $region40
    $region39: #{downsample_forward.1} parent=5 // pred_region
      %s192 = ssub.s32 %s11, 1
      %p193 = scmp.lt.s32.totalorder %s16, 1
      %s194 = scalar_select %p193, %s16, 1
      %s195 = smul.addr %s194, 10
      %s196 = smul.addr %s195, 4
      %s197 = scalar_lea.vmem %s0, %s196
      %p198 = pneg %p37
      %p199 = pneg %p34
      %p200 = pneg %p58
      %p201 = pneg %p55
      %p202 = pneg %p79
      %p203 = pneg %p76
      %p204 = pneg %p100
      %p205 = pneg %p97
      %p206 = pneg %p121
      %p207 = pneg %p118
      %p208 = pneg %p147
      %p209 = pneg %p144
      %p210 = scmp.lt.s32.totalorder %s16, 1
      %s211 = scalar_select %p210, %s16, 1
      %s212 = smul.addr %s211, 4
      %s213 = smul.addr %s212, 4
      %s214 = scalar_lea.vmem %s5, %s213
      %p215 = scmp.lt.s32.totalorder %s16, 1
      %s216 = scalar_select %p215, %s16, 1
      %s217 = smul.addr %s216, 10
      %s218 = smul.addr %s217, 4
      %s219 = scalar_lea.vmem %s0, %s218
      %p220 = scmp.lt.s32.totalorder %s16, 1
      %s221 = scalar_select %p220, %s16, 1
      %s222 = smul.addr %s221, 4
      %s223 = smul.addr %s222, 4
      %s224 = scalar_lea.vmem %s5, %s223
      %v226 = vld [vmem:[%s219] sm:$0xf]
      %v227 = vld [vmem:[%s219 + $0x4] sm:$0xf]
      %v228 = vld [vmem:[%s219 + $0x8] sm:$0xf]
      %v229 = vld [vmem:[%s219 + $0xc] sm:$0xf]
      %v230 = vld [vmem:[%s1] sm:$0xf]
      %v231 = vld [vmem:[%s1 + $0x4] sm:$0x3]
      %s232 = sadd.s32 0, 8
      %s233 = sshra.s32 %s232, 3
      %s234 = sand.u32 %s232, 7
      %s235 = smul.addr %s233, 4
      %s236 = scalar_lea.vmem %s219, %s235
      %v237 = vld [vmem:[%s236] sm:$0xf]
      %v238 = vld [vmem:[%s236 + $0x4] sm:$0xf]
      %v239 = vld [vmem:[%s236 + $0x8] sm:$0xf]
      %v240 = vld [vmem:[%s236 + $0xc] sm:$0xf]
      %s241 = scalar_lea.vmem %s1, 8
      %v242 = vld [vmem:[%s241] sm:$0xf]
      %v243 = vld [vmem:[%s241 + $0x4] sm:$0x3]
      %v248 = vunpack.c.l.b16 %v237
      %v249 = vunpack.c.l.b16 %v238
      %v250 = vunpack.c.l.b16 %v239
      %v251 = vunpack.c.l.b16 %v240
      %v252 = vpack.c.b16 %v249, %v248
      %v253 = vpack.c.b16 %v251, %v250
      %v256 = vunpack.c.l.b16 %v242
      %v257 = vunpack.c.l.b16 %v243
      %v258 = vpack.c.b16 %v257, %v256
      %vm259 = vcmask 97280
      %v261 = vsel %vm259, %v252, 0
      %v264 = vsel %vm259, %v253, 0
      %vm266 = vcmask 1045504
      %v268 = vsel %vm266, %v258, 0
      %270 = vmatprep.subr.bf16.mxu0 0
      %271 = vmatpush1.bf16.msra.mxu0 0
      %272 = vmatprep.subr.bf16.mxu0 0
      %273 = vmatpush1.bf16.msra.mxu0 0
      %274 = vmatprep.subr.bf16.mxu0 0
      %275 = vmatpush1.bf16.msra.mxu0 0
      %276 = vmatprep.subr.bf16.mxu0 0
      %277 = vmatpush1.bf16.msra.mxu0 0
      %278 = vmatprep.subr.bf16.mxu0 0
      %279 = vmatpush1.bf16.msra.mxu0 0
      %280 = vmatprep.subr.bf16.mxu0 0
      %281 = vmatpush1.bf16.msra.mxu0 0
      %282 = vmatprep.subr.bf16.mxu0 0
      %283 = vmatpush1.bf16.msra.mxu0 0
      %284 = vmatprep.subr.bf16.mxu0 0
      %285 = vmatpush1.bf16.msra.mxu0 %v268
      %286 = vmatprep.subr.bf16.mxu0 0
      %287 = vmatpush2.bf16.msra.mxu0 0
      %288 = vmatprep.subr.bf16.mxu0 0
      %289 = vmatpush2.bf16.msra.mxu0 0
      %290 = vmatprep.subr.bf16.mxu0 0
      %291 = vmatpush2.bf16.msra.mxu0 0
      %292 = vmatprep.subr.bf16.mxu0 0
      %293 = vmatpush2.bf16.msra.mxu0 0
      %294 = vmatprep.subr.bf16.mxu0 0
      %295 = vmatpush2.bf16.msra.mxu0 0
      %296 = vmatprep.subr.bf16.mxu0 0
      %297 = vmatpush2.bf16.msra.mxu0 0
      %298 = vmatprep.subr.bf16.mxu0 0
      %299 = vmatpush2.bf16.msra.mxu0 0
      %300 = vmatprep.subr.bf16.mxu0 0
      %301 = vmatpush2.bf16.msra.mxu0 0
      %302 = vmatprep.mubr.bf16.mxu0 0
      %303 = vmatmul.mubr.bf16.gmra.mxu0 %v261
      %v304 = vpop.f32.mrf.mxu0
      %v305 = vadd.f32 0.0, %v304
      %v306 = vpop.f32.mrf.mxu0
      %v307 = vpop.f32.mrf.mxu0
      %v308 = vadd.f32 0.0, %v307
      %v309 = vpop.f32.mrf.mxu0
      %310 = vmatprep.mubr.bf16.mxu0 0
      %311 = vmatmul.mubr.bf16.gmra.mxu0 %v264
      %v312 = vpop.f32.mrf.mxu0
      %v313 = vadd.f32 0.0, %v312
      %v314 = vpop.f32.mrf.mxu0
      %v315 = vpop.f32.mrf.mxu0
      %v316 = vadd.f32 0.0, %v315
      %v317 = vpop.f32.mrf.mxu0
      %318 = vdwg.mxu0
      %v323 = vunpack.c.l.b16 %v226
      %v324 = vunpack.c.l.b16 %v227
      %v325 = vunpack.c.l.b16 %v228
      %v326 = vunpack.c.l.b16 %v229
      %v327 = vpack.c.b16 %v324, %v323
      %v328 = vpack.c.b16 %v326, %v325
      %v331 = vunpack.c.l.b16 %v230
      %v332 = vunpack.c.l.b16 %v231
      %v333 = vpack.c.b16 %v332, %v331
      %v335 = vsel %vm259, %v327, 0
      %v338 = vsel %vm259, %v328, 0
      %v341 = vsel %vm266, %v333, 0
      %343 = vmatprep.subr.bf16.mxu0 0
      %344 = vmatpush1.bf16.msra.mxu0 0
      %345 = vmatprep.subr.bf16.mxu0 0
      %346 = vmatpush1.bf16.msra.mxu0 0
      %347 = vmatprep.subr.bf16.mxu0 0
      %348 = vmatpush1.bf16.msra.mxu0 0
      %349 = vmatprep.subr.bf16.mxu0 0
      %350 = vmatpush1.bf16.msra.mxu0 0
      %351 = vmatprep.subr.bf16.mxu0 0
      %352 = vmatpush1.bf16.msra.mxu0 0
      %353 = vmatprep.subr.bf16.mxu0 0
      %354 = vmatpush1.bf16.msra.mxu0 0
      %355 = vmatprep.subr.bf16.mxu0 0
      %356 = vmatpush1.bf16.msra.mxu0 0
      %357 = vmatprep.subr.bf16.mxu0 0
      %358 = vmatpush1.bf16.msra.mxu0 %v341
      %359 = vmatprep.subr.bf16.mxu0 0
      %360 = vmatpush2.bf16.msra.mxu0 0
      %361 = vmatprep.subr.bf16.mxu0 0
      %362 = vmatpush2.bf16.msra.mxu0 0
      %363 = vmatprep.subr.bf16.mxu0 0
      %364 = vmatpush2.bf16.msra.mxu0 0
      %365 = vmatprep.subr.bf16.mxu0 0
      %366 = vmatpush2.bf16.msra.mxu0 0
      %367 = vmatprep.subr.bf16.mxu0 0
      %368 = vmatpush2.bf16.msra.mxu0 0
      %369 = vmatprep.subr.bf16.mxu0 0
      %370 = vmatpush2.bf16.msra.mxu0 0
      %371 = vmatprep.subr.bf16.mxu0 0
      %372 = vmatpush2.bf16.msra.mxu0 0
      %373 = vmatprep.subr.bf16.mxu0 0
      %374 = vmatpush2.bf16.msra.mxu0 0
      %375 = vmatprep.mubr.bf16.mxu0 0
      %376 = vmatmul.mubr.bf16.gmra.mxu0 %v335
      %v377 = vpop.f32.mrf.mxu0
      %v378 = vadd.f32 %v305, %v377
      %v379 = vpop.f32.mrf.mxu0
      %v380 = vpop.f32.mrf.mxu0
      %v381 = vadd.f32 %v308, %v380
      %v382 = vpop.f32.mrf.mxu0
      %383 = vmatprep.mubr.bf16.mxu0 0
      %384 = vmatmul.mubr.bf16.gmra.mxu0 %v338
      %v385 = vpop.f32.mrf.mxu0
      %v386 = vadd.f32 %v313, %v385
      %v387 = vpop.f32.mrf.mxu0
      %v388 = vpop.f32.mrf.mxu0
      %v389 = vadd.f32 %v316, %v388
      %v390 = vpop.f32.mrf.mxu0
      %391 = vdwg.mxu0
      %s392 = sadd.s32 0, 16
      %s393 = sshra.s32 %s392, 3
      %s394 = sand.u32 %s392, 7
      %s395 = smul.addr %s393, 4
      %s396 = scalar_lea.vmem %s219, %s395
      %v397 = vld [vmem:[%s396] sm:$0xf]
      %v398 = vld [vmem:[%s396 + $0x4] sm:$0xf]
      %v399 = vld [vmem:[%s396 + $0x8] sm:$0xf]
      %v400 = vld [vmem:[%s396 + $0xc] sm:$0xf]
      %s401 = scalar_lea.vmem %s1, 16
      %v402 = vld [vmem:[%s401] sm:$0xf]
      %v403 = vld [vmem:[%s401 + $0x4] sm:$0x3]
      %v408 = vunpack.c.l.b16 %v397
      %v409 = vunpack.c.l.b16 %v398
      %v410 = vunpack.c.l.b16 %v399
      %v411 = vunpack.c.l.b16 %v400
      %v412 = vpack.c.b16 %v409, %v408
      %v413 = vpack.c.b16 %v411, %v410
      %v416 = vunpack.c.l.b16 %v402
      %v417 = vunpack.c.l.b16 %v403
      %v418 = vpack.c.b16 %v417, %v416
      %v420 = vsel %vm259, %v412, 0
      %v423 = vsel %vm259, %v413, 0
      %v426 = vsel %vm266, %v418, 0
      %428 = vmatprep.subr.bf16.mxu0 0
      %429 = vmatpush1.bf16.msra.mxu0 0
      %430 = vmatprep.subr.bf16.mxu0 0
      %431 = vmatpush1.bf16.msra.mxu0 0
      %432 = vmatprep.subr.bf16.mxu0 0
      %433 = vmatpush1.bf16.msra.mxu0 0
      %434 = vmatprep.subr.bf16.mxu0 0
      %435 = vmatpush1.bf16.msra.mxu0 0
      %436 = vmatprep.subr.bf16.mxu0 0
      %437 = vmatpush1.bf16.msra.mxu0 0
      %438 = vmatprep.subr.bf16.mxu0 0
      %439 = vmatpush1.bf16.msra.mxu0 0
      %440 = vmatprep.subr.bf16.mxu0 0
      %441 = vmatpush1.bf16.msra.mxu0 0
      %442 = vmatprep.subr.bf16.mxu0 0
      %443 = vmatpush1.bf16.msra.mxu0 %v426
      %444 = vmatprep.subr.bf16.mxu0 0
      %445 = vmatpush2.bf16.msra.mxu0 0
      %446 = vmatprep.subr.bf16.mxu0 0
      %447 = vmatpush2.bf16.msra.mxu0 0
      %448 = vmatprep.subr.bf16.mxu0 0
      %449 = vmatpush2.bf16.msra.mxu0 0
      %450 = vmatprep.subr.bf16.mxu0 0
      %451 = vmatpush2.bf16.msra.mxu0 0
      %452 = vmatprep.subr.bf16.mxu0 0
      %453 = vmatpush2.bf16.msra.mxu0 0
      %454 = vmatprep.subr.bf16.mxu0 0
      %455 = vmatpush2.bf16.msra.mxu0 0
      %456 = vmatprep.subr.bf16.mxu0 0
      %457 = vmatpush2.bf16.msra.mxu0 0
      %458 = vmatprep.subr.bf16.mxu0 0
      %459 = vmatpush2.bf16.msra.mxu0 0
      %460 = vmatprep.mubr.bf16.mxu0 0
      %461 = vmatmul.mubr.bf16.gmra.mxu0 %v420
      %v462 = vpop.f32.mrf.mxu0
      %v463 = vadd.f32 0.0, %v462
      %v464 = vpop.f32.mrf.mxu0
      %v465 = vpop.f32.mrf.mxu0
      %v466 = vadd.f32 0.0, %v465
      %v467 = vpop.f32.mrf.mxu0
      %468 = vmatprep.mubr.bf16.mxu0 0
      %469 = vmatmul.mubr.bf16.gmra.mxu0 %v423
      %v470 = vpop.f32.mrf.mxu0
      %v471 = vadd.f32 0.0, %v470
      %v472 = vpop.f32.mrf.mxu0
      %v473 = vpop.f32.mrf.mxu0
      %v474 = vadd.f32 0.0, %v473
      %v475 = vpop.f32.mrf.mxu0
      %476 = vdwg.mxu0
      %v477 = vadd.f32 %v378, %v463
      %v478 = vadd.f32 %v381, %v466
      %v479 = vadd.f32 %v386, %v471
      %v480 = vadd.f32 %v389, %v474
      %v481 = vld [vmem:[%s2] sm:$0x1]
      %v483 = vlaneseq
      %v484 = vshrl.u32 %v483, 7
      %v485 = vsub.s32 0, %v484
      %v486 = vrot.slane %v481, %v485
      %v488 = vadd.f32 %v477, %v486
      %v489 = vadd.f32 %v478, %v486
      %v490 = vadd.f32 %v479, %v486
      %v491 = vadd.f32 %v480, %v486
      %v492 = vand.u32 2147483647, %v488
      %v493 = vand.u32 2147483647, %v489
      %v494 = vand.u32 2147483647, %v490
      %v495 = vand.u32 2147483647, %v491
      %v496 = vmul.f32 %v492, 0.70710677
      %v497 = vmul.f32 %v493, 0.70710677
      %v498 = vmul.f32 %v494, 0.70710677
      %v499 = vmul.f32 %v495, 0.70710677
      %v500 = vmul.f32 %v496, 0.3275911
      %v501 = vmul.f32 %v497, 0.3275911
      %v502 = vmul.f32 %v498, 0.3275911
      %v503 = vmul.f32 %v499, 0.3275911
      %v504 = vadd.f32 %v500, 1.0
      %v505 = vadd.f32 %v501, 1.0
      %v506 = vadd.f32 %v502, 1.0
      %v507 = vadd.f32 %v503, 1.0
      %v508 = vrcp.pop %v504
      %v509 = vrcp.pop %v505
      %v510 = vrcp.pop %v506
      %v511 = vrcp.pop %v507
      %v512 = vmul.f32 %v508, 1.0614054
      %v513 = vmul.f32 %v509, 1.0614054
      %v514 = vmul.f32 %v510, 1.0614054
      %v515 = vmul.f32 %v511, 1.0614054
      %v516 = vadd.f32 %v512, -1.4531521
      %v517 = vadd.f32 %v513, -1.4531521
      %v518 = vadd.f32 %v514, -1.4531521
      %v519 = vadd.f32 %v515, -1.4531521
      %v520 = vmul.f32 %v516, %v508
      %v521 = vmul.f32 %v517, %v509
      %v522 = vmul.f32 %v518, %v510
      %v523 = vmul.f32 %v519, %v511
      %v524 = vadd.f32 %v520, 1.4214138
      %v525 = vadd.f32 %v521, 1.4214138
      %v526 = vadd.f32 %v522, 1.4214138
      %v527 = vadd.f32 %v523, 1.4214138
      %v528 = vmul.f32 %v524, %v508
      %v529 = vmul.f32 %v525, %v509
      %v530 = vmul.f32 %v526, %v510
      %v531 = vmul.f32 %v527, %v511
      %v532 = vadd.f32 %v528, -0.28449672
      %v533 = vadd.f32 %v529, -0.28449672
      %v534 = vadd.f32 %v530, -0.28449672
      %v535 = vadd.f32 %v531, -0.28449672
      %v536 = vmul.f32 %v532, %v508
      %v537 = vmul.f32 %v533, %v509
      %v538 = vmul.f32 %v534, %v510
      %v539 = vmul.f32 %v535, %v511
      %v540 = vadd.f32 %v536, 0.2548296
      %v541 = vadd.f32 %v537, 0.2548296
      %v542 = vadd.f32 %v538, 0.2548296
      %v543 = vadd.f32 %v539, 0.2548296
      %v544 = vmul.f32 %v540, %v508
      %v545 = vmul.f32 %v541, %v509
      %v546 = vmul.f32 %v542, %v510
      %v547 = vmul.f32 %v543, %v511
      %v548 = vsub.f32 0.0, %v496
      %v549 = vsub.f32 0.0, %v497
      %v550 = vsub.f32 0.0, %v498
      %v551 = vsub.f32 0.0, %v499
      %v552 = vmul.f32 %v548, %v496
      %v553 = vmul.f32 %v549, %v497
      %v554 = vmul.f32 %v550, %v498
      %v555 = vmul.f32 %v551, %v499
      %v556 = vmul.f32 %v552, 1.442695
      %v557 = vpow.pop %v556
      %v558 = vmul.f32 %v553, 1.442695
      %v559 = vpow.pop %v558
      %v560 = vmul.f32 %v554, 1.442695
      %v561 = vpow.pop %v560
      %v562 = vmul.f32 %v555, 1.442695
      %v563 = vpow.pop %v562
      %v564 = vmul.f32 %v544, %v557
      %v565 = vmul.f32 %v545, %v559
      %v566 = vmul.f32 %v546, %v561
      %v567 = vmul.f32 %v547, %v563
      %v568 = vsub.f32 1.0, %v564
      %v569 = vsub.f32 1.0, %v565
      %v570 = vsub.f32 1.0, %v566
      %v571 = vsub.f32 1.0, %v567
      %vm572 = vcmp.ge.f32.partialorder %v488, 0.0
      %vm573 = vcmp.ge.f32.partialorder %v489, 0.0
      %vm574 = vcmp.ge.f32.partialorder %v490, 0.0
      %vm575 = vcmp.ge.f32.partialorder %v491, 0.0
      %v576 = vsub.f32 0.0, %v568
      %v577 = vsub.f32 0.0, %v569
      %v578 = vsub.f32 0.0, %v570
      %v579 = vsub.f32 0.0, %v571
      %v580 = vsel %vm572, %v568, %v576
      %v581 = vsel %vm573, %v569, %v577
      %v582 = vsel %vm574, %v570, %v578
      %v583 = vsel %vm575, %v571, %v579
      %v584 = vmul.f32 %v488, 0.5
      %v585 = vmul.f32 %v489, 0.5
      %v586 = vmul.f32 %v490, 0.5
      %v587 = vmul.f32 %v491, 0.5
      %v588 = vadd.f32 %v580, 1.0
      %v589 = vadd.f32 %v581, 1.0
      %v590 = vadd.f32 %v582, 1.0
      %v591 = vadd.f32 %v583, 1.0
      %v592 = vmul.f32 %v584, %v588
      %v593 = vmul.f32 %v585, %v589
      %v594 = vmul.f32 %v586, %v590
      %v595 = vmul.f32 %v587, %v591
      %v596 = vpack.c.bf16 %v593, %v592
      %v597 = vpack.c.bf16 %v595, %v594
      %v600 = vunpack.c.l.b16 %v596
      %v601 = vunpack.c.h.b16 %v596
      %v602 = vunpack.c.l.b16 %v597
      %v603 = vunpack.c.h.b16 %v597
      %v604 = vpack.c.b16 %v600, %v600
      %v605 = vpack.c.b16 %v601, %v601
      %v606 = vpack.c.b16 %v602, %v602
      %v607 = vpack.c.b16 %v603, %v603
      %612 = vst [vmem:[#allocation2] sm:$0xf] %v604
      %613 = vst [vmem:[#allocation2 + $0x4] sm:$0xf] %v605
      %614 = vst [vmem:[#allocation2 + $0x8] sm:$0xf] %v606
      %615 = vst [vmem:[#allocation2 + $0xc] sm:$0xf] %v607
      %s616 = scalar_lea.vmem %s219, 16
      %v617 = vld [vmem:[%s616] sm:$0xf]
      %v618 = vld [vmem:[%s616 + $0x4] sm:$0xf]
      %v619 = vld [vmem:[%s616 + $0x8] sm:$0xf]
      %v620 = vld [vmem:[%s616 + $0xc] sm:$0xf]
      %v621 = vld [vmem:[%s1] sm:$0xf]
      %v622 = vld [vmem:[%s1 + $0x4] sm:$0x3]
      %s623 = sadd.s32 32, 8
      %s624 = sshra.s32 %s623, 3
      %s625 = sand.u32 %s623, 7
      %s626 = smul.addr %s624, 4
      %s627 = scalar_lea.vmem %s219, %s626
      %v628 = vld [vmem:[%s627] sm:$0xf]
      %v629 = vld [vmem:[%s627 + $0x4] sm:$0xf]
      %v630 = vld [vmem:[%s627 + $0x8] sm:$0xf]
      %v631 = vld [vmem:[%s627 + $0xc] sm:$0xf]
      %v632 = vld [vmem:[%s241] sm:$0xf]
      %v633 = vld [vmem:[%s241 + $0x4] sm:$0x3]
      %v638 = vunpack.c.l.b16 %v628
      %v639 = vunpack.c.l.b16 %v629
      %v640 = vunpack.c.l.b16 %v630
      %v641 = vunpack.c.l.b16 %v631
      %v642 = vpack.c.b16 %v639, %v638
      %v643 = vpack.c.b16 %v641, %v640
      %v646 = vunpack.c.l.b16 %v632
      %v647 = vunpack.c.l.b16 %v633
      %v648 = vpack.c.b16 %v647, %v646
      %v650 = vsel %vm259, %v642, 0
      %v653 = vsel %vm259, %v643, 0
      %v656 = vsel %vm266, %v648, 0
      %658 = vmatprep.subr.bf16.mxu0 0
      %659 = vmatpush1.bf16.msra.mxu0 0
      %660 = vmatprep.subr.bf16.mxu0 0
      %661 = vmatpush1.bf16.msra.mxu0 0
      %662 = vmatprep.subr.bf16.mxu0 0
      %663 = vmatpush1.bf16.msra.mxu0 0
      %664 = vmatprep.subr.bf16.mxu0 0
      %665 = vmatpush1.bf16.msra.mxu0 0
      %666 = vmatprep.subr.bf16.mxu0 0
      %667 = vmatpush1.bf16.msra.mxu0 0
      %668 = vmatprep.subr.bf16.mxu0 0
      %669 = vmatpush1.bf16.msra.mxu0 0
      %670 = vmatprep.subr.bf16.mxu0 0
      %671 = vmatpush1.bf16.msra.mxu0 0
      %672 = vmatprep.subr.bf16.mxu0 0
      %673 = vmatpush1.bf16.msra.mxu0 %v656
      %674 = vmatprep.subr.bf16.mxu0 0
      %675 = vmatpush2.bf16.msra.mxu0 0
      %676 = vmatprep.subr.bf16.mxu0 0
      %677 = vmatpush2.bf16.msra.mxu0 0
      %678 = vmatprep.subr.bf16.mxu0 0
      %679 = vmatpush2.bf16.msra.mxu0 0
      %680 = vmatprep.subr.bf16.mxu0 0
      %681 = vmatpush2.bf16.msra.mxu0 0
      %682 = vmatprep.subr.bf16.mxu0 0
      %683 = vmatpush2.bf16.msra.mxu0 0
      %684 = vmatprep.subr.bf16.mxu0 0
      %685 = vmatpush2.bf16.msra.mxu0 0
      %686 = vmatprep.subr.bf16.mxu0 0
      %687 = vmatpush2.bf16.msra.mxu0 0
      %688 = vmatprep.subr.bf16.mxu0 0
      %689 = vmatpush2.bf16.msra.mxu0 0
      %690 = vmatprep.mubr.bf16.mxu0 0
      %691 = vmatmul.mubr.bf16.gmra.mxu0 %v650
      %v692 = vpop.f32.mrf.mxu0
      %v693 = vadd.f32 0.0, %v692
      %v694 = vpop.f32.mrf.mxu0
      %v695 = vpop.f32.mrf.mxu0
      %v696 = vadd.f32 0.0, %v695
      %v697 = vpop.f32.mrf.mxu0
      %698 = vmatprep.mubr.bf16.mxu0 0
      %699 = vmatmul.mubr.bf16.gmra.mxu0 %v653
      %v700 = vpop.f32.mrf.mxu0
      %v701 = vadd.f32 0.0, %v700
      %v702 = vpop.f32.mrf.mxu0
      %v703 = vpop.f32.mrf.mxu0
      %v704 = vadd.f32 0.0, %v703
      %v705 = vpop.f32.mrf.mxu0
      %706 = vdwg.mxu0
      %v711 = vunpack.c.l.b16 %v617
      %v712 = vunpack.c.l.b16 %v618
      %v713 = vunpack.c.l.b16 %v619
      %v714 = vunpack.c.l.b16 %v620
      %v715 = vpack.c.b16 %v712, %v711
      %v716 = vpack.c.b16 %v714, %v713
      %v719 = vunpack.c.l.b16 %v621
      %v720 = vunpack.c.l.b16 %v622
      %v721 = vpack.c.b16 %v720, %v719
      %v723 = vsel %vm259, %v715, 0
      %v726 = vsel %vm259, %v716, 0
      %v729 = vsel %vm266, %v721, 0
      %731 = vmatprep.subr.bf16.mxu0 0
      %732 = vmatpush1.bf16.msra.mxu0 0
      %733 = vmatprep.subr.bf16.mxu0 0
      %734 = vmatpush1.bf16.msra.mxu0 0
      %735 = vmatprep.subr.bf16.mxu0 0
      %736 = vmatpush1.bf16.msra.mxu0 0
      %737 = vmatprep.subr.bf16.mxu0 0
      %738 = vmatpush1.bf16.msra.mxu0 0
      %739 = vmatprep.subr.bf16.mxu0 0
      %740 = vmatpush1.bf16.msra.mxu0 0
      %741 = vmatprep.subr.bf16.mxu0 0
      %742 = vmatpush1.bf16.msra.mxu0 0
      %743 = vmatprep.subr.bf16.mxu0 0
      %744 = vmatpush1.bf16.msra.mxu0 0
      %745 = vmatprep.subr.bf16.mxu0 0
      %746 = vmatpush1.bf16.msra.mxu0 %v729
      %747 = vmatprep.subr.bf16.mxu0 0
      %748 = vmatpush2.bf16.msra.mxu0 0
      %749 = vmatprep.subr.bf16.mxu0 0
      %750 = vmatpush2.bf16.msra.mxu0 0
      %751 = vmatprep.subr.bf16.mxu0 0
      %752 = vmatpush2.bf16.msra.mxu0 0
      %753 = vmatprep.subr.bf16.mxu0 0
      %754 = vmatpush2.bf16.msra.mxu0 0
      %755 = vmatprep.subr.bf16.mxu0 0
      %756 = vmatpush2.bf16.msra.mxu0 0
      %757 = vmatprep.subr.bf16.mxu0 0
      %758 = vmatpush2.bf16.msra.mxu0 0
      %759 = vmatprep.subr.bf16.mxu0 0
      %760 = vmatpush2.bf16.msra.mxu0 0
      %761 = vmatprep.subr.bf16.mxu0 0
      %762 = vmatpush2.bf16.msra.mxu0 0
      %763 = vmatprep.mubr.bf16.mxu0 0
      %764 = vmatmul.mubr.bf16.gmra.mxu0 %v723
      %v765 = vpop.f32.mrf.mxu0
      %v766 = vadd.f32 %v693, %v765
      %v767 = vpop.f32.mrf.mxu0
      %v768 = vpop.f32.mrf.mxu0
      %v769 = vadd.f32 %v696, %v768
      %v770 = vpop.f32.mrf.mxu0
      %771 = vmatprep.mubr.bf16.mxu0 0
      %772 = vmatmul.mubr.bf16.gmra.mxu0 %v726
      %v773 = vpop.f32.mrf.mxu0
      %v774 = vadd.f32 %v701, %v773
      %v775 = vpop.f32.mrf.mxu0
      %v776 = vpop.f32.mrf.mxu0
      %v777 = vadd.f32 %v704, %v776
      %v778 = vpop.f32.mrf.mxu0
      %779 = vdwg.mxu0
      %s780 = sadd.s32 32, 16
      %s781 = sshra.s32 %s780, 3
      %s782 = sand.u32 %s780, 7
      %s783 = smul.addr %s781, 4
      %s784 = scalar_lea.vmem %s219, %s783
      %v785 = vld [vmem:[%s784] sm:$0xf]
      %v786 = vld [vmem:[%s784 + $0x4] sm:$0xf]
      %v787 = vld [vmem:[%s784 + $0x8] sm:$0xf]
      %v788 = vld [vmem:[%s784 + $0xc] sm:$0xf]
      %v789 = vld [vmem:[%s401] sm:$0xf]
      %v790 = vld [vmem:[%s401 + $0x4] sm:$0x3]
      %v795 = vunpack.c.l.b16 %v785
      %v796 = vunpack.c.l.b16 %v786
      %v797 = vunpack.c.l.b16 %v787
      %v798 = vunpack.c.l.b16 %v788
      %v799 = vpack.c.b16 %v796, %v795
      %v800 = vpack.c.b16 %v798, %v797
      %v803 = vunpack.c.l.b16 %v789
      %v804 = vunpack.c.l.b16 %v790
      %v805 = vpack.c.b16 %v804, %v803
      %v807 = vsel %vm259, %v799, 0
      %v810 = vsel %vm259, %v800, 0
      %v813 = vsel %vm266, %v805, 0
      %815 = vmatprep.subr.bf16.mxu0 0
      %816 = vmatpush1.bf16.msra.mxu0 0
      %817 = vmatprep.subr.bf16.mxu0 0
      %818 = vmatpush1.bf16.msra.mxu0 0
      %819 = vmatprep.subr.bf16.mxu0 0
      %820 = vmatpush1.bf16.msra.mxu0 0
      %821 = vmatprep.subr.bf16.mxu0 0
      %822 = vmatpush1.bf16.msra.mxu0 0
      %823 = vmatprep.subr.bf16.mxu0 0
      %824 = vmatpush1.bf16.msra.mxu0 0
      %825 = vmatprep.subr.bf16.mxu0 0
      %826 = vmatpush1.bf16.msra.mxu0 0
      %827 = vmatprep.subr.bf16.mxu0 0
      %828 = vmatpush1.bf16.msra.mxu0 0
      %829 = vmatprep.subr.bf16.mxu0 0
      %830 = vmatpush1.bf16.msra.mxu0 %v813
      %831 = vmatprep.subr.bf16.mxu0 0
      %832 = vmatpush2.bf16.msra.mxu0 0
      %833 = vmatprep.subr.bf16.mxu0 0
      %834 = vmatpush2.bf16.msra.mxu0 0
      %835 = vmatprep.subr.bf16.mxu0 0
      %836 = vmatpush2.bf16.msra.mxu0 0
      %837 = vmatprep.subr.bf16.mxu0 0
      %838 = vmatpush2.bf16.msra.mxu0 0
      %839 = vmatprep.subr.bf16.mxu0 0
      %840 = vmatpush2.bf16.msra.mxu0 0
      %841 = vmatprep.subr.bf16.mxu0 0
      %842 = vmatpush2.bf16.msra.mxu0 0
      %843 = vmatprep.subr.bf16.mxu0 0
      %844 = vmatpush2.bf16.msra.mxu0 0
      %845 = vmatprep.subr.bf16.mxu0 0
      %846 = vmatpush2.bf16.msra.mxu0 0
      %847 = vmatprep.mubr.bf16.mxu0 0
      %848 = vmatmul.mubr.bf16.gmra.mxu0 %v807
      %v849 = vpop.f32.mrf.mxu0
      %v850 = vadd.f32 0.0, %v849
      %v851 = vpop.f32.mrf.mxu0
      %v852 = vpop.f32.mrf.mxu0
      %v853 = vadd.f32 0.0, %v852
      %v854 = vpop.f32.mrf.mxu0
      %855 = vmatprep.mubr.bf16.mxu0 0
      %856 = vmatmul.mubr.bf16.gmra.mxu0 %v810
      %v857 = vpop.f32.mrf.mxu0
      %v858 = vadd.f32 0.0, %v857
      %v859 = vpop.f32.mrf.mxu0
      %v860 = vpop.f32.mrf.mxu0
      %v861 = vadd.f32 0.0, %v860
      %v862 = vpop.f32.mrf.mxu0
      %863 = vdwg.mxu0
      %v864 = vadd.f32 %v766, %v850
      %v865 = vadd.f32 %v769, %v853
      %v866 = vadd.f32 %v774, %v858
      %v867 = vadd.f32 %v777, %v861
      %v868 = vld [vmem:[%s2] sm:$0x1]
      %v870 = vlaneseq
      %v871 = vshrl.u32 %v870, 7
      %v872 = vsub.s32 0, %v871
      %v873 = vrot.slane %v868, %v872
      %v875 = vadd.f32 %v864, %v873
      %v876 = vadd.f32 %v865, %v873
      %v877 = vadd.f32 %v866, %v873
      %v878 = vadd.f32 %v867, %v873
      %v879 = vand.u32 2147483647, %v875
      %v880 = vand.u32 2147483647, %v876
      %v881 = vand.u32 2147483647, %v877
      %v882 = vand.u32 2147483647, %v878
      %v883 = vmul.f32 %v879, 0.70710677
      %v884 = vmul.f32 %v880, 0.70710677
      %v885 = vmul.f32 %v881, 0.70710677
      %v886 = vmul.f32 %v882, 0.70710677
      %v887 = vmul.f32 %v883, 0.3275911
      %v888 = vmul.f32 %v884, 0.3275911
      %v889 = vmul.f32 %v885, 0.3275911
      %v890 = vmul.f32 %v886, 0.3275911
      %v891 = vadd.f32 %v887, 1.0
      %v892 = vadd.f32 %v888, 1.0
      %v893 = vadd.f32 %v889, 1.0
      %v894 = vadd.f32 %v890, 1.0
      %v895 = vrcp.pop %v891
      %v896 = vrcp.pop %v892
      %v897 = vrcp.pop %v893
      %v898 = vrcp.pop %v894
      %v899 = vmul.f32 %v895, 1.0614054
      %v900 = vmul.f32 %v896, 1.0614054
      %v901 = vmul.f32 %v897, 1.0614054
      %v902 = vmul.f32 %v898, 1.0614054
      %v903 = vadd.f32 %v899, -1.4531521
      %v904 = vadd.f32 %v900, -1.4531521
      %v905 = vadd.f32 %v901, -1.4531521
      %v906 = vadd.f32 %v902, -1.4531521
      %v907 = vmul.f32 %v903, %v895
      %v908 = vmul.f32 %v904, %v896
      %v909 = vmul.f32 %v905, %v897
      %v910 = vmul.f32 %v906, %v898
      %v911 = vadd.f32 %v907, 1.4214138
      %v912 = vadd.f32 %v908, 1.4214138
      %v913 = vadd.f32 %v909, 1.4214138
      %v914 = vadd.f32 %v910, 1.4214138
      %v915 = vmul.f32 %v911, %v895
      %v916 = vmul.f32 %v912, %v896
      %v917 = vmul.f32 %v913, %v897
      %v918 = vmul.f32 %v914, %v898
      %v919 = vadd.f32 %v915, -0.28449672
      %v920 = vadd.f32 %v916, -0.28449672
      %v921 = vadd.f32 %v917, -0.28449672
      %v922 = vadd.f32 %v918, -0.28449672
      %v923 = vmul.f32 %v919, %v895
      %v924 = vmul.f32 %v920, %v896
      %v925 = vmul.f32 %v921, %v897
      %v926 = vmul.f32 %v922, %v898
      %v927 = vadd.f32 %v923, 0.2548296
      %v928 = vadd.f32 %v924, 0.2548296
      %v929 = vadd.f32 %v925, 0.2548296
      %v930 = vadd.f32 %v926, 0.2548296
      %v931 = vmul.f32 %v927, %v895
      %v932 = vmul.f32 %v928, %v896
      %v933 = vmul.f32 %v929, %v897
      %v934 = vmul.f32 %v930, %v898
      %v935 = vsub.f32 0.0, %v883
      %v936 = vsub.f32 0.0, %v884
      %v937 = vsub.f32 0.0, %v885
      %v938 = vsub.f32 0.0, %v886
      %v939 = vmul.f32 %v935, %v883
      %v940 = vmul.f32 %v936, %v884
      %v941 = vmul.f32 %v937, %v885
      %v942 = vmul.f32 %v938, %v886
      %v943 = vmul.f32 %v939, 1.442695
      %v944 = vpow.pop %v943
      %v945 = vmul.f32 %v940, 1.442695
      %v946 = vpow.pop %v945
      %v947 = vmul.f32 %v941, 1.442695
      %v948 = vpow.pop %v947
      %v949 = vmul.f32 %v942, 1.442695
      %v950 = vpow.pop %v949
      %v951 = vmul.f32 %v931, %v944
      %v952 = vmul.f32 %v932, %v946
      %v953 = vmul.f32 %v933, %v948
      %v954 = vmul.f32 %v934, %v950
      %v955 = vsub.f32 1.0, %v951
      %v956 = vsub.f32 1.0, %v952
      %v957 = vsub.f32 1.0, %v953
      %v958 = vsub.f32 1.0, %v954
      %vm959 = vcmp.ge.f32.partialorder %v875, 0.0
      %vm960 = vcmp.ge.f32.partialorder %v876, 0.0
      %vm961 = vcmp.ge.f32.partialorder %v877, 0.0
      %vm962 = vcmp.ge.f32.partialorder %v878, 0.0
      %v963 = vsub.f32 0.0, %v955
      %v964 = vsub.f32 0.0, %v956
      %v965 = vsub.f32 0.0, %v957
      %v966 = vsub.f32 0.0, %v958
      %v967 = vsel %vm959, %v955, %v963
      %v968 = vsel %vm960, %v956, %v964
      %v969 = vsel %vm961, %v957, %v965
      %v970 = vsel %vm962, %v958, %v966
      %v971 = vmul.f32 %v875, 0.5
      %v972 = vmul.f32 %v876, 0.5
      %v973 = vmul.f32 %v877, 0.5
      %v974 = vmul.f32 %v878, 0.5
      %v975 = vadd.f32 %v967, 1.0
      %v976 = vadd.f32 %v968, 1.0
      %v977 = vadd.f32 %v969, 1.0
      %v978 = vadd.f32 %v970, 1.0
      %v979 = vmul.f32 %v971, %v975
      %v980 = vmul.f32 %v972, %v976
      %v981 = vmul.f32 %v973, %v977
      %v982 = vmul.f32 %v974, %v978
      %v983 = vpack.c.bf16 %v980, %v979
      %v984 = vpack.c.bf16 %v982, %v981
      %v987 = vunpack.c.l.b16 %v983
      %v988 = vunpack.c.h.b16 %v983
      %v989 = vunpack.c.l.b16 %v984
      %v990 = vunpack.c.h.b16 %v984
      %v991 = vpack.c.b16 %v987, %v987
      %v992 = vpack.c.b16 %v988, %v988
      %v993 = vpack.c.b16 %v989, %v989
      %v994 = vpack.c.b16 %v990, %v990
      %s999 = scalar_lea.vmem [#allocation2], 16
      %1000 = vst [vmem:[%s999] sm:$0xf] %v991
      %1001 = vst [vmem:[%s999 + $0x4] sm:$0xf] %v992
      %1002 = vst [vmem:[%s999 + $0x8] sm:$0xf] %v993
      %1003 = vst [vmem:[%s999 + $0xc] sm:$0xf] %v994
      %v1004 = vld [vmem:[#allocation2] sm:$0xf]
      %v1005 = vld [vmem:[#allocation2 + $0x4] sm:$0xf]
      %v1006 = vld [vmem:[#allocation2 + $0x8] sm:$0xf]
      %v1007 = vld [vmem:[#allocation2 + $0xc] sm:$0xf]
      %v1008 = vld [vmem:[#allocation2 + $0x10] sm:$0xf]
      %v1009 = vld [vmem:[#allocation2 + $0x14] sm:$0xf]
      %1010 = vst [vmem:[#allocation3] sm:$0xf] %v1004
      %1011 = vst [vmem:[#allocation3 + $0xc] sm:$0xf] %v1005
      %1012 = vst [vmem:[#allocation3 + $0x18] sm:$0xf] %v1006
      %1013 = vst [vmem:[#allocation3 + $0x24] sm:$0xf] %v1007
      %1014 = vst [vmem:[#allocation3 + $0x30] sm:$0xf] %v1008
      %1015 = vst [vmem:[#allocation3 + $0x3c] sm:$0xf] %v1009
      %v1016 = vld [vmem:[#allocation2] sm:$0xf]
      %v1017 = vld [vmem:[#allocation2 + $0x4] sm:$0xf]
      %v1018 = vld [vmem:[#allocation2 + $0x8] sm:$0xf]
      %v1019 = vld [vmem:[#allocation2 + $0xc] sm:$0xf]
      %v1020 = vld [vmem:[#allocation2 + $0x10] sm:$0xf]
      %v1021 = vld [vmem:[#allocation2 + $0x14] sm:$0xf]
      %v1022 = vld [vmem:[#allocation2 + $0x18] sm:$0x1]
      %vm1023 = vsmask.f32 3328
      %vm1024 = vsmask.f32 7440
      %vm1025 = vmor %vm1023, %vm1024
      %v1027 = vshrl.u32 %v1016, 16
      %v1029 = vrot.slane %v1027, 4
      %v1030 = vshll.u32 %v1016, 16
      %v1032 = vrot.slane %v1030, 5
      %v1033 = vor.u32 %v1029, %v1032
      %v1034 = vrot.slane %v1033, 4
      %v1036 = vshll.u32 %v1017, 16
      %v1038 = vrot.slane %v1036, 5
      %v1039 = vsel %vm1025, %v1034, %v1038
      %v1040 = vshrl.u32 %v1017, 16
      %v1042 = vrot.slane %v1040, 4
      %v1043 = vor.u32 %v1042, %v1038
      %v1044 = vrot.slane %v1043, 4
      %v1046 = vshll.u32 %v1018, 16
      %v1048 = vrot.slane %v1046, 5
      %v1049 = vsel %vm1025, %v1044, %v1048
      %v1050 = vshrl.u32 %v1018, 16
      %v1052 = vrot.slane %v1050, 4
      %v1053 = vor.u32 %v1052, %v1048
      %v1054 = vrot.slane %v1053, 4
      %v1056 = vshll.u32 %v1019, 16
      %v1058 = vrot.slane %v1056, 5
      %v1059 = vsel %vm1025, %v1054, %v1058
      %v1060 = vshrl.u32 %v1019, 16
      %v1062 = vrot.slane %v1060, 4
      %v1063 = vor.u32 %v1062, %v1058
      %v1064 = vrot.slane %v1063, 4
      %v1066 = vshll.u32 %v1020, 16
      %v1068 = vrot.slane %v1066, 5
      %v1069 = vsel %vm1025, %v1064, %v1068
      %v1070 = vshrl.u32 %v1020, 16
      %v1072 = vrot.slane %v1070, 4
      %v1073 = vor.u32 %v1072, %v1068
      %v1074 = vrot.slane %v1073, 4
      %v1076 = vshll.u32 %v1021, 16
      %v1078 = vrot.slane %v1076, 5
      %v1079 = vsel %vm1025, %v1074, %v1078
      %v1080 = vshrl.u32 %v1021, 16
      %v1082 = vrot.slane %v1080, 4
      %v1083 = vor.u32 %v1082, %v1078
      %v1084 = vrot.slane %v1083, 4
      %v1086 = vshll.u32 %v1022, 16
      %v1088 = vrot.slane %v1086, 5
      %v1089 = vsel %vm1025, %v1084, %v1088
      %1096 = vst [vmem:[#allocation3 + $0x4] sm:$0xf] %v1039
      %1097 = vst [vmem:[#allocation3 + $0x10] sm:$0xf] %v1049
      %1098 = vst [vmem:[#allocation3 + $0x1c] sm:$0xf] %v1059
      %1099 = vst [vmem:[#allocation3 + $0x28] sm:$0xf] %v1069
      %1100 = vst [vmem:[#allocation3 + $0x34] sm:$0xf] %v1079
      %1101 = vst [vmem:[#allocation3 + $0x40] sm:$0xf] %v1089
      %v1102 = vld [vmem:[#allocation2] sm:$0xe]
      %v1103 = vld [vmem:[#allocation2 + $0x4] sm:$0xf]
      %v1104 = vld [vmem:[#allocation2 + $0x8] sm:$0xf]
      %v1105 = vld [vmem:[#allocation2 + $0xc] sm:$0xf]
      %v1106 = vld [vmem:[#allocation2 + $0x10] sm:$0xf]
      %v1107 = vld [vmem:[#allocation2 + $0x14] sm:$0xf]
      %v1108 = vld [vmem:[#allocation2 + $0x18] sm:$0x1]
      %vm1116 = vcmask 1042432
      %vm1117 = vcmask 1046532
      %vm1118 = vmor %vm1116, %vm1117
      %v1119 = vrot.slane %v1102, 5
      %v1120 = vrot.slane %v1119, 4
      %v1121 = vrot.slane %v1103, 5
      %v1122 = vsel %vm1118, %v1120, %v1121
      %v1123 = vrot.slane %v1121, 4
      %v1124 = vrot.slane %v1104, 5
      %v1125 = vsel %vm1118, %v1123, %v1124
      %v1126 = vrot.slane %v1124, 4
      %v1127 = vrot.slane %v1105, 5
      %v1128 = vsel %vm1118, %v1126, %v1127
      %v1129 = vrot.slane %v1127, 4
      %v1130 = vrot.slane %v1106, 5
      %v1131 = vsel %vm1118, %v1129, %v1130
      %v1132 = vrot.slane %v1130, 4
      %v1133 = vrot.slane %v1107, 5
      %v1134 = vsel %vm1118, %v1132, %v1133
      %v1135 = vrot.slane %v1133, 4
      %v1136 = vrot.slane %v1108, 5
      %v1137 = vsel %vm1118, %v1135, %v1136
      %1144 = vst [vmem:[#allocation3 + $0x8] sm:$0xf] %v1122
      %1145 = vst [vmem:[#allocation3 + $0x14] sm:$0xf] %v1125
      %1146 = vst [vmem:[#allocation3 + $0x20] sm:$0xf] %v1128
      %1147 = vst [vmem:[#allocation3 + $0x2c] sm:$0xf] %v1131
      %1148 = vst [vmem:[#allocation3 + $0x38] sm:$0xf] %v1134
      %1149 = vst [vmem:[#allocation3 + $0x44] sm:$0xf] %v1137
      %s1150 = smul.u32 0, 3
      %s1151 = smul.addr %s1150, 4
      %s1152 = scalar_lea.vmem [#allocation3], %s1151
      %v1153 = vld [vmem:[%s1152] sm:$0xff]
      %v1154 = vld [vmem:[%s1152 + $0x8] sm:$0xf]
      %v1155 = vld [vmem:[%s1152 + $0xc] sm:$0xff]
      %v1156 = vld [vmem:[%s1152 + $0x14] sm:$0xf]
      %v1157 = vld [vmem:[%s1152 + $0x18] sm:$0xff]
      %v1158 = vld [vmem:[%s1152 + $0x20] sm:$0xf]
      %v1159 = vld [vmem:[%s1152 + $0x24] sm:$0xff]
      %v1160 = vld [vmem:[%s1152 + $0x2c] sm:$0xf]
      %v1161 = vld [vmem:[%s3] sm:$0xf]
      %v1162 = vld [vmem:[%s3 + $0x4] sm:$0xf]
      %v1163 = vld [vmem:[%s3 + $0x8] sm:$0xf]
      %v1164 = vld [vmem:[%s3 + $0xc] sm:$0xf]
      %v1165 = vld [vmem:[%s3 + $0x10] sm:$0xf]
      %v1166 = vld [vmem:[%s3 + $0x14] sm:$0xf]
      %v1167 = vld [vmem:[%s3 + $0x18] sm:$0xf]
      %v1168 = vld [vmem:[%s3 + $0x1c] sm:$0xf]
      %v1169 = vld [vmem:[%s3 + $0x20] sm:$0xf]
      %v1170 = vld [vmem:[%s3 + $0x24] sm:$0xf]
      %v1171 = vld [vmem:[%s3 + $0x28] sm:$0xf]
      %v1172 = vld [vmem:[%s3 + $0x2c] sm:$0xf]
      %v1173 = vld [vmem:[%s3 + $0x30] sm:$0xf]
      %v1174 = vld [vmem:[%s3 + $0x34] sm:$0xf]
      %v1175 = vld [vmem:[%s3 + $0x38] sm:$0xf]
      %v1176 = vld [vmem:[%s3 + $0x3c] sm:$0xf]
      %v1177 = vld [vmem:[%s3 + $0x40] sm:$0xf]
      %v1178 = vld [vmem:[%s3 + $0x44] sm:$0xf]
      %v1179 = vld [vmem:[%s3 + $0x48] sm:$0xf]
      %v1180 = vld [vmem:[%s3 + $0x4c] sm:$0xf]
      %v1181 = vld [vmem:[%s3 + $0x50] sm:$0xf]
      %v1182 = vld [vmem:[%s3 + $0x54] sm:$0xf]
      %v1183 = vld [vmem:[%s3 + $0x58] sm:$0xf]
      %v1184 = vld [vmem:[%s3 + $0x5c] sm:$0xf]
      %v1185 = vld [vmem:[%s3 + $0x60] sm:$0xf]
      %v1186 = vld [vmem:[%s3 + $0x64] sm:$0xf]
      %v1187 = vld [vmem:[%s3 + $0x68] sm:$0xf]
      %v1188 = vld [vmem:[%s3 + $0x6c] sm:$0xf]
      %v1189 = vld [vmem:[%s3 + $0x70] sm:$0xf]
      %v1190 = vld [vmem:[%s3 + $0x74] sm:$0xf]
      %v1191 = vld [vmem:[%s3 + $0x78] sm:$0xf]
      %v1192 = vld [vmem:[%s3 + $0x7c] sm:$0xf]
      %v1193 = vld [vmem:[%s3 + $0x80] sm:$0xf]
      %v1194 = vld [vmem:[%s3 + $0x84] sm:$0xf]
      %v1195 = vld [vmem:[%s3 + $0x88] sm:$0xf]
      %v1196 = vld [vmem:[%s3 + $0x8c] sm:$0xf]
      %v1197 = vld [vmem:[%s3 + $0x90] sm:$0xf]
      %v1198 = vld [vmem:[%s3 + $0x94] sm:$0xf]
      %v1199 = vld [vmem:[%s3 + $0x98] sm:$0xf]
      %v1200 = vld [vmem:[%s3 + $0x9c] sm:$0xf]
      %v1201 = vld [vmem:[%s3 + $0xa0] sm:$0xf]
      %v1202 = vld [vmem:[%s3 + $0xa4] sm:$0xf]
      %v1203 = vld [vmem:[%s3 + $0xa8] sm:$0xf]
      %v1204 = vld [vmem:[%s3 + $0xac] sm:$0xf]
      %v1205 = vld [vmem:[%s3 + $0xb0] sm:$0xf]
      %v1206 = vld [vmem:[%s3 + $0xb4] sm:$0xf]
      %v1207 = vld [vmem:[%s3 + $0xb8] sm:$0xf]
      %v1208 = vld [vmem:[%s3 + $0xbc] sm:$0xf]
      %s1209 = smul.u32 %s233, 3
      %s1210 = smul.addr %s1209, 4
      %s1211 = scalar_lea.vmem [#allocation3], %s1210
      %v1212 = vld [vmem:[%s1211] sm:$0xff]
      %v1213 = vld [vmem:[%s1211 + $0x8] sm:$0xf]
      %v1214 = vld [vmem:[%s1211 + $0xc] sm:$0xff]
      %v1215 = vld [vmem:[%s1211 + $0x14] sm:$0xf]
      %v1216 = vld [vmem:[%s1211 + $0x18] sm:$0xff]
      %v1217 = vld [vmem:[%s1211 + $0x20] sm:$0xf]
      %v1218 = vld [vmem:[%s1211 + $0x24] sm:$0xff]
      %v1219 = vld [vmem:[%s1211 + $0x2c] sm:$0xf]
      %s1220 = scalar_lea.vmem %s3, 192
      %v1221 = vld [vmem:[%s1220] sm:$0xf]
      %v1222 = vld [vmem:[%s1220 + $0x4] sm:$0xf]
      %v1223 = vld [vmem:[%s1220 + $0x8] sm:$0xf]
      %v1224 = vld [vmem:[%s1220 + $0xc] sm:$0xf]
      %v1225 = vld [vmem:[%s1220 + $0x10] sm:$0xf]
      %v1226 = vld [vmem:[%s1220 + $0x14] sm:$0xf]
      %v1227 = vld [vmem:[%s1220 + $0x18] sm:$0xf]
      %v1228 = vld [vmem:[%s1220 + $0x1c] sm:$0xf]
      %v1229 = vld [vmem:[%s1220 + $0x20] sm:$0xf]
      %v1230 = vld [vmem:[%s1220 + $0x24] sm:$0xf]
      %v1231 = vld [vmem:[%s1220 + $0x28] sm:$0xf]
      %v1232 = vld [vmem:[%s1220 + $0x2c] sm:$0xf]
      %v1233 = vld [vmem:[%s1220 + $0x30] sm:$0xf]
      %v1234 = vld [vmem:[%s1220 + $0x34] sm:$0xf]
      %v1235 = vld [vmem:[%s1220 + $0x38] sm:$0xf]
      %v1236 = vld [vmem:[%s1220 + $0x3c] sm:$0xf]
      %v1237 = vld [vmem:[%s1220 + $0x40] sm:$0xf]
      %v1238 = vld [vmem:[%s1220 + $0x44] sm:$0xf]
      %v1239 = vld [vmem:[%s1220 + $0x48] sm:$0xf]
      %v1240 = vld [vmem:[%s1220 + $0x4c] sm:$0xf]
      %v1241 = vld [vmem:[%s1220 + $0x50] sm:$0xf]
      %v1242 = vld [vmem:[%s1220 + $0x54] sm:$0xf]
      %v1243 = vld [vmem:[%s1220 + $0x58] sm:$0xf]
      %v1244 = vld [vmem:[%s1220 + $0x5c] sm:$0xf]
      %v1245 = vld [vmem:[%s1220 + $0x60] sm:$0xf]
      %v1246 = vld [vmem:[%s1220 + $0x64] sm:$0xf]
      %v1247 = vld [vmem:[%s1220 + $0x68] sm:$0xf]
      %v1248 = vld [vmem:[%s1220 + $0x6c] sm:$0xf]
      %v1249 = vld [vmem:[%s1220 + $0x70] sm:$0xf]
      %v1250 = vld [vmem:[%s1220 + $0x74] sm:$0xf]
      %v1251 = vld [vmem:[%s1220 + $0x78] sm:$0xf]
      %v1252 = vld [vmem:[%s1220 + $0x7c] sm:$0xf]
      %v1253 = vld [vmem:[%s1220 + $0x80] sm:$0xf]
      %v1254 = vld [vmem:[%s1220 + $0x84] sm:$0xf]
      %v1255 = vld [vmem:[%s1220 + $0x88] sm:$0xf]
      %v1256 = vld [vmem:[%s1220 + $0x8c] sm:$0xf]
      %v1257 = vld [vmem:[%s1220 + $0x90] sm:$0xf]
      %v1258 = vld [vmem:[%s1220 + $0x94] sm:$0xf]
      %v1259 = vld [vmem:[%s1220 + $0x98] sm:$0xf]
      %v1260 = vld [vmem:[%s1220 + $0x9c] sm:$0xf]
      %v1261 = vld [vmem:[%s1220 + $0xa0] sm:$0xf]
      %v1262 = vld [vmem:[%s1220 + $0xa4] sm:$0xf]
      %v1263 = vld [vmem:[%s1220 + $0xa8] sm:$0xf]
      %v1264 = vld [vmem:[%s1220 + $0xac] sm:$0xf]
      %v1265 = vld [vmem:[%s1220 + $0xb0] sm:$0xf]
      %v1266 = vld [vmem:[%s1220 + $0xb4] sm:$0xf]
      %v1267 = vld [vmem:[%s1220 + $0xb8] sm:$0xf]
      %v1268 = vld [vmem:[%s1220 + $0xbc] sm:$0xf]
      %v1277 = vunpack.c.l.b16 %v1212
      %v1278 = vunpack.c.h.b16 %v1212
      %v1279 = vunpack.c.l.b16 %v1213
      %v1280 = vunpack.c.l.b16 %v1214
      %v1281 = vunpack.c.h.b16 %v1214
      %v1282 = vunpack.c.l.b16 %v1215
      %v1283 = vunpack.c.l.b16 %v1216
      %v1284 = vunpack.c.h.b16 %v1216
      %v1285 = vunpack.c.l.b16 %v1217
      %v1286 = vunpack.c.l.b16 %v1218
      %v1287 = vunpack.c.h.b16 %v1218
      %v1288 = vunpack.c.l.b16 %v1219
      %v1289 = vpack.c.b16 %v1280, %v1277
      %v1290 = vpack.c.b16 %v1281, %v1278
      %v1291 = vpack.c.b16 %v1282, %v1279
      %v1292 = vpack.c.b16 %v1286, %v1283
      %v1293 = vpack.c.b16 %v1287, %v1284
      %v1294 = vpack.c.b16 %v1288, %v1285
      %v1349 = vunpack.c.l.b16 %v1221
      %v1350 = vunpack.c.l.b16 %v1222
      %v1351 = vunpack.c.l.b16 %v1223
      %v1352 = vunpack.c.l.b16 %v1224
      %v1353 = vunpack.c.l.b16 %v1225
      %v1354 = vunpack.c.l.b16 %v1226
      %v1355 = vunpack.c.l.b16 %v1227
      %v1356 = vunpack.c.l.b16 %v1228
      %v1357 = vunpack.c.l.b16 %v1229
      %v1358 = vunpack.c.l.b16 %v1230
      %v1359 = vunpack.c.l.b16 %v1231
      %v1360 = vunpack.c.l.b16 %v1232
      %v1361 = vunpack.c.l.b16 %v1233
      %v1362 = vunpack.c.l.b16 %v1234
      %v1363 = vunpack.c.l.b16 %v1235
      %v1364 = vunpack.c.l.b16 %v1236
      %v1365 = vunpack.c.l.b16 %v1237
      %v1366 = vunpack.c.l.b16 %v1238
      %v1367 = vunpack.c.l.b16 %v1239
      %v1368 = vunpack.c.l.b16 %v1240
      %v1369 = vunpack.c.l.b16 %v1241
      %v1370 = vunpack.c.l.b16 %v1242
      %v1371 = vunpack.c.l.b16 %v1243
      %v1372 = vunpack.c.l.b16 %v1244
      %v1373 = vunpack.c.l.b16 %v1245
      %v1374 = vunpack.c.l.b16 %v1246
      %v1375 = vunpack.c.l.b16 %v1247
      %v1376 = vunpack.c.l.b16 %v1248
      %v1377 = vunpack.c.l.b16 %v1249
      %v1378 = vunpack.c.l.b16 %v1250
      %v1379 = vunpack.c.l.b16 %v1251
      %v1380 = vunpack.c.l.b16 %v1252
      %v1381 = vunpack.c.l.b16 %v1253
      %v1382 = vunpack.c.l.b16 %v1254
      %v1383 = vunpack.c.l.b16 %v1255
      %v1384 = vunpack.c.l.b16 %v1256
      %v1385 = vunpack.c.l.b16 %v1257
      %v1386 = vunpack.c.l.b16 %v1258
      %v1387 = vunpack.c.l.b16 %v1259
      %v1388 = vunpack.c.l.b16 %v1260
      %v1389 = vunpack.c.l.b16 %v1261
      %v1390 = vunpack.c.l.b16 %v1262
      %v1391 = vunpack.c.l.b16 %v1263
      %v1392 = vunpack.c.l.b16 %v1264
      %v1393 = vunpack.c.l.b16 %v1265
      %v1394 = vunpack.c.l.b16 %v1266
      %v1395 = vunpack.c.l.b16 %v1267
      %v1396 = vunpack.c.l.b16 %v1268
      %v1397 = vpack.c.b16 %v1350, %v1349
      %v1398 = vpack.c.b16 %v1352, %v1351
      %v1399 = vpack.c.b16 %v1354, %v1353
      %v1400 = vpack.c.b16 %v1356, %v1355
      %v1401 = vpack.c.b16 %v1358, %v1357
      %v1402 = vpack.c.b16 %v1360, %v1359
      %v1403 = vpack.c.b16 %v1362, %v1361
      %v1404 = vpack.c.b16 %v1364, %v1363
      %v1405 = vpack.c.b16 %v1366, %v1365
      %v1406 = vpack.c.b16 %v1368, %v1367
      %v1407 = vpack.c.b16 %v1370, %v1369
      %v1408 = vpack.c.b16 %v1372, %v1371
      %v1409 = vpack.c.b16 %v1374, %v1373
      %v1410 = vpack.c.b16 %v1376, %v1375
      %v1411 = vpack.c.b16 %v1378, %v1377
      %v1412 = vpack.c.b16 %v1380, %v1379
      %v1413 = vpack.c.b16 %v1382, %v1381
      %v1414 = vpack.c.b16 %v1384, %v1383
      %v1415 = vpack.c.b16 %v1386, %v1385
      %v1416 = vpack.c.b16 %v1388, %v1387
      %v1417 = vpack.c.b16 %v1390, %v1389
      %v1418 = vpack.c.b16 %v1392, %v1391
      %v1419 = vpack.c.b16 %v1394, %v1393
      %v1420 = vpack.c.b16 %v1396, %v1395
      %1445 = vmatprep.subr.bf16.mxu0 0
      %1446 = vmatpush1.bf16.msra.mxu0 %v1404
      %1447 = vmatprep.subr.bf16.mxu0 0
      %1448 = vmatpush1.bf16.msra.mxu0 %v1403
      %1449 = vmatprep.subr.bf16.mxu0 0
      %1450 = vmatpush1.bf16.msra.mxu0 %v1402
      %1451 = vmatprep.subr.bf16.mxu0 0
      %1452 = vmatpush1.bf16.msra.mxu0 %v1401
      %1453 = vmatprep.subr.bf16.mxu0 0
      %1454 = vmatpush1.bf16.msra.mxu0 %v1400
      %1455 = vmatprep.subr.bf16.mxu0 0
      %1456 = vmatpush1.bf16.msra.mxu0 %v1399
      %1457 = vmatprep.subr.bf16.mxu0 0
      %1458 = vmatpush1.bf16.msra.mxu0 %v1398
      %1459 = vmatprep.subr.bf16.mxu0 0
      %1460 = vmatpush1.bf16.msra.mxu0 %v1397
      %1461 = vmatprep.subr.bf16.mxu0 0
      %1462 = vmatpush2.bf16.msra.mxu0 %v1412
      %1463 = vmatprep.subr.bf16.mxu0 0
      %1464 = vmatpush2.bf16.msra.mxu0 %v1411
      %1465 = vmatprep.subr.bf16.mxu0 0
      %1466 = vmatpush2.bf16.msra.mxu0 %v1410
      %1467 = vmatprep.subr.bf16.mxu0 0
      %1468 = vmatpush2.bf16.msra.mxu0 %v1409
      %1469 = vmatprep.subr.bf16.mxu0 0
      %1470 = vmatpush2.bf16.msra.mxu0 %v1408
      %1471 = vmatprep.subr.bf16.mxu0 0
      %1472 = vmatpush2.bf16.msra.mxu0 %v1407
      %1473 = vmatprep.subr.bf16.mxu0 0
      %1474 = vmatpush2.bf16.msra.mxu0 %v1406
      %1475 = vmatprep.subr.bf16.mxu0 0
      %1476 = vmatpush2.bf16.msra.mxu0 %v1405
      %1477 = vmatprep.mubr.bf16.mxu0 %v1290
      %1478 = vmatmul.mubr.bf16.gmra.mxu0 %v1289
      %v1479 = vpop.f32.mrf.mxu0
      %v1480 = vadd.f32 0.0, %v1479
      %v1481 = vpop.f32.mrf.mxu0
      %v1482 = vpop.f32.mrf.mxu0
      %v1483 = vadd.f32 0.0, %v1482
      %v1484 = vpop.f32.mrf.mxu0
      %1485 = vmatprep.mubr.bf16.mxu0 %v1293
      %1486 = vmatmul.mubr.bf16.gmra.mxu0 %v1292
      %v1487 = vpop.f32.mrf.mxu0
      %v1488 = vadd.f32 0.0, %v1487
      %v1489 = vpop.f32.mrf.mxu0
      %v1490 = vpop.f32.mrf.mxu0
      %v1491 = vadd.f32 0.0, %v1490
      %v1492 = vpop.f32.mrf.mxu0
      %1493 = vdwg.mxu0
      %1494 = vmatprep.subr.bf16.mxu0 0
      %1495 = vmatpush1.bf16.msra.mxu0 %v1420
      %1496 = vmatprep.subr.bf16.mxu0 0
      %1497 = vmatpush1.bf16.msra.mxu0 %v1419
      %1498 = vmatprep.subr.bf16.mxu0 0
      %1499 = vmatpush1.bf16.msra.mxu0 %v1418
      %1500 = vmatprep.subr.bf16.mxu0 0
      %1501 = vmatpush1.bf16.msra.mxu0 %v1417
      %1502 = vmatprep.subr.bf16.mxu0 0
      %1503 = vmatpush1.bf16.msra.mxu0 %v1416
      %1504 = vmatprep.subr.bf16.mxu0 0
      %1505 = vmatpush1.bf16.msra.mxu0 %v1415
      %1506 = vmatprep.subr.bf16.mxu0 0
      %1507 = vmatpush1.bf16.msra.mxu0 %v1414
      %1508 = vmatprep.subr.bf16.mxu0 0
      %1509 = vmatpush1.bf16.msra.mxu0 %v1413
      %1510 = vmatprep.subr.bf16.mxu0 0
      %1511 = vmatpush2.bf16.msra.mxu0 0
      %1512 = vmatprep.subr.bf16.mxu0 0
      %1513 = vmatpush2.bf16.msra.mxu0 0
      %1514 = vmatprep.subr.bf16.mxu0 0
      %1515 = vmatpush2.bf16.msra.mxu0 0
      %1516 = vmatprep.subr.bf16.mxu0 0
      %1517 = vmatpush2.bf16.msra.mxu0 0
      %1518 = vmatprep.subr.bf16.mxu0 0
      %1519 = vmatpush2.bf16.msra.mxu0 0
      %1520 = vmatprep.subr.bf16.mxu0 0
      %1521 = vmatpush2.bf16.msra.mxu0 0
      %1522 = vmatprep.subr.bf16.mxu0 0
      %1523 = vmatpush2.bf16.msra.mxu0 0
      %1524 = vmatprep.subr.bf16.mxu0 0
      %1525 = vmatpush2.bf16.msra.mxu0 0
      %1526 = vmatprep.mubr.bf16.mxu0 0
      %1527 = vmatmul.mubr.bf16.gmra.mxu0 %v1291
      %v1528 = vpop.f32.mrf.mxu0
      %v1529 = vadd.f32 %v1480, %v1528
      %v1530 = vpop.f32.mrf.mxu0
      %v1531 = vpop.f32.mrf.mxu0
      %v1532 = vadd.f32 %v1483, %v1531
      %v1533 = vpop.f32.mrf.mxu0
      %1534 = vmatprep.mubr.bf16.mxu0 0
      %1535 = vmatmul.mubr.bf16.gmra.mxu0 %v1294
      %v1536 = vpop.f32.mrf.mxu0
      %v1537 = vadd.f32 %v1488, %v1536
      %v1538 = vpop.f32.mrf.mxu0
      %v1539 = vpop.f32.mrf.mxu0
      %v1540 = vadd.f32 %v1491, %v1539
      %v1541 = vpop.f32.mrf.mxu0
      %1542 = vdwg.mxu0
      %v1551 = vunpack.c.l.b16 %v1153
      %v1552 = vunpack.c.h.b16 %v1153
      %v1553 = vunpack.c.l.b16 %v1154
      %v1554 = vunpack.c.l.b16 %v1155
      %v1555 = vunpack.c.h.b16 %v1155
      %v1556 = vunpack.c.l.b16 %v1156
      %v1557 = vunpack.c.l.b16 %v1157
      %v1558 = vunpack.c.h.b16 %v1157
      %v1559 = vunpack.c.l.b16 %v1158
      %v1560 = vunpack.c.l.b16 %v1159
      %v1561 = vunpack.c.h.b16 %v1159
      %v1562 = vunpack.c.l.b16 %v1160
      %v1563 = vpack.c.b16 %v1554, %v1551
      %v1564 = vpack.c.b16 %v1555, %v1552
      %v1565 = vpack.c.b16 %v1556, %v1553
      %v1566 = vpack.c.b16 %v1560, %v1557
      %v1567 = vpack.c.b16 %v1561, %v1558
      %v1568 = vpack.c.b16 %v1562, %v1559
      %v1623 = vunpack.c.l.b16 %v1161
      %v1624 = vunpack.c.l.b16 %v1162
      %v1625 = vunpack.c.l.b16 %v1163
      %v1626 = vunpack.c.l.b16 %v1164
      %v1627 = vunpack.c.l.b16 %v1165
      %v1628 = vunpack.c.l.b16 %v1166
      %v1629 = vunpack.c.l.b16 %v1167
      %v1630 = vunpack.c.l.b16 %v1168
      %v1631 = vunpack.c.l.b16 %v1169
      %v1632 = vunpack.c.l.b16 %v1170
      %v1633 = vunpack.c.l.b16 %v1171
      %v1634 = vunpack.c.l.b16 %v1172
      %v1635 = vunpack.c.l.b16 %v1173
      %v1636 = vunpack.c.l.b16 %v1174
      %v1637 = vunpack.c.l.b16 %v1175
      %v1638 = vunpack.c.l.b16 %v1176
      %v1639 = vunpack.c.l.b16 %v1177
      %v1640 = vunpack.c.l.b16 %v1178
      %v1641 = vunpack.c.l.b16 %v1179
      %v1642 = vunpack.c.l.b16 %v1180
      %v1643 = vunpack.c.l.b16 %v1181
      %v1644 = vunpack.c.l.b16 %v1182
      %v1645 = vunpack.c.l.b16 %v1183
      %v1646 = vunpack.c.l.b16 %v1184
      %v1647 = vunpack.c.l.b16 %v1185
      %v1648 = vunpack.c.l.b16 %v1186
      %v1649 = vunpack.c.l.b16 %v1187
      %v1650 = vunpack.c.l.b16 %v1188
      %v1651 = vunpack.c.l.b16 %v1189
      %v1652 = vunpack.c.l.b16 %v1190
      %v1653 = vunpack.c.l.b16 %v1191
      %v1654 = vunpack.c.l.b16 %v1192
      %v1655 = vunpack.c.l.b16 %v1193
      %v1656 = vunpack.c.l.b16 %v1194
      %v1657 = vunpack.c.l.b16 %v1195
      %v1658 = vunpack.c.l.b16 %v1196
      %v1659 = vunpack.c.l.b16 %v1197
      %v1660 = vunpack.c.l.b16 %v1198
      %v1661 = vunpack.c.l.b16 %v1199
      %v1662 = vunpack.c.l.b16 %v1200
      %v1663 = vunpack.c.l.b16 %v1201
      %v1664 = vunpack.c.l.b16 %v1202
      %v1665 = vunpack.c.l.b16 %v1203
      %v1666 = vunpack.c.l.b16 %v1204
      %v1667 = vunpack.c.l.b16 %v1205
      %v1668 = vunpack.c.l.b16 %v1206
      %v1669 = vunpack.c.l.b16 %v1207
      %v1670 = vunpack.c.l.b16 %v1208
      %v1671 = vpack.c.b16 %v1624, %v1623
      %v1672 = vpack.c.b16 %v1626, %v1625
      %v1673 = vpack.c.b16 %v1628, %v1627
      %v1674 = vpack.c.b16 %v1630, %v1629
      %v1675 = vpack.c.b16 %v1632, %v1631
      %v1676 = vpack.c.b16 %v1634, %v1633
      %v1677 = vpack.c.b16 %v1636, %v1635
      %v1678 = vpack.c.b16 %v1638, %v1637
      %v1679 = vpack.c.b16 %v1640, %v1639
      %v1680 = vpack.c.b16 %v1642, %v1641
      %v1681 = vpack.c.b16 %v1644, %v1643
      %v1682 = vpack.c.b16 %v1646, %v1645
      %v1683 = vpack.c.b16 %v1648, %v1647
      %v1684 = vpack.c.b16 %v1650, %v1649
      %v1685 = vpack.c.b16 %v1652, %v1651
      %v1686 = vpack.c.b16 %v1654, %v1653
      %v1687 = vpack.c.b16 %v1656, %v1655
      %v1688 = vpack.c.b16 %v1658, %v1657
      %v1689 = vpack.c.b16 %v1660, %v1659
      %v1690 = vpack.c.b16 %v1662, %v1661
      %v1691 = vpack.c.b16 %v1664, %v1663
      %v1692 = vpack.c.b16 %v1666, %v1665
      %v1693 = vpack.c.b16 %v1668, %v1667
      %v1694 = vpack.c.b16 %v1670, %v1669
      %1719 = vmatprep.subr.bf16.mxu0 0
      %1720 = vmatpush1.bf16.msra.mxu0 %v1678
      %1721 = vmatprep.subr.bf16.mxu0 0
      %1722 = vmatpush1.bf16.msra.mxu0 %v1677
      %1723 = vmatprep.subr.bf16.mxu0 0
      %1724 = vmatpush1.bf16.msra.mxu0 %v1676
      %1725 = vmatprep.subr.bf16.mxu0 0
      %1726 = vmatpush1.bf16.msra.mxu0 %v1675
      %1727 = vmatprep.subr.bf16.mxu0 0
      %1728 = vmatpush1.bf16.msra.mxu0 %v1674
      %1729 = vmatprep.subr.bf16.mxu0 0
      %1730 = vmatpush1.bf16.msra.mxu0 %v1673
      %1731 = vmatprep.subr.bf16.mxu0 0
      %1732 = vmatpush1.bf16.msra.mxu0 %v1672
      %1733 = vmatprep.subr.bf16.mxu0 0
      %1734 = vmatpush1.bf16.msra.mxu0 %v1671
      %1735 = vmatprep.subr.bf16.mxu0 0
      %1736 = vmatpush2.bf16.msra.mxu0 %v1686
      %1737 = vmatprep.subr.bf16.mxu0 0
      %1738 = vmatpush2.bf16.msra.mxu0 %v1685
      %1739 = vmatprep.subr.bf16.mxu0 0
      %1740 = vmatpush2.bf16.msra.mxu0 %v1684
      %1741 = vmatprep.subr.bf16.mxu0 0
      %1742 = vmatpush2.bf16.msra.mxu0 %v1683
      %1743 = vmatprep.subr.bf16.mxu0 0
      %1744 = vmatpush2.bf16.msra.mxu0 %v1682
      %1745 = vmatprep.subr.bf16.mxu0 0
      %1746 = vmatpush2.bf16.msra.mxu0 %v1681
      %1747 = vmatprep.subr.bf16.mxu0 0
      %1748 = vmatpush2.bf16.msra.mxu0 %v1680
      %1749 = vmatprep.subr.bf16.mxu0 0
      %1750 = vmatpush2.bf16.msra.mxu0 %v1679
      %1751 = vmatprep.mubr.bf16.mxu0 %v1564
      %1752 = vmatmul.mubr.bf16.gmra.mxu0 %v1563
      %v1753 = vpop.f32.mrf.mxu0
      %v1754 = vadd.f32 %v1529, %v1753
      %v1755 = vpop.f32.mrf.mxu0
      %v1756 = vpop.f32.mrf.mxu0
      %v1757 = vadd.f32 %v1532, %v1756
      %v1758 = vpop.f32.mrf.mxu0
      %1759 = vmatprep.mubr.bf16.mxu0 %v1567
      %1760 = vmatmul.mubr.bf16.gmra.mxu0 %v1566
      %v1761 = vpop.f32.mrf.mxu0
      %v1762 = vadd.f32 %v1537, %v1761
      %v1763 = vpop.f32.mrf.mxu0
      %v1764 = vpop.f32.mrf.mxu0
      %v1765 = vadd.f32 %v1540, %v1764
      %v1766 = vpop.f32.mrf.mxu0
      %1767 = vdwg.mxu0
      %1768 = vmatprep.subr.bf16.mxu0 0
      %1769 = vmatpush1.bf16.msra.mxu0 %v1694
      %1770 = vmatprep.subr.bf16.mxu0 0
      %1771 = vmatpush1.bf16.msra.mxu0 %v1693
      %1772 = vmatprep.subr.bf16.mxu0 0
      %1773 = vmatpush1.bf16.msra.mxu0 %v1692
      %1774 = vmatprep.subr.bf16.mxu0 0
      %1775 = vmatpush1.bf16.msra.mxu0 %v1691
      %1776 = vmatprep.subr.bf16.mxu0 0
      %1777 = vmatpush1.bf16.msra.mxu0 %v1690
      %1778 = vmatprep.subr.bf16.mxu0 0
      %1779 = vmatpush1.bf16.msra.mxu0 %v1689
      %1780 = vmatprep.subr.bf16.mxu0 0
      %1781 = vmatpush1.bf16.msra.mxu0 %v1688
      %1782 = vmatprep.subr.bf16.mxu0 0
      %1783 = vmatpush1.bf16.msra.mxu0 %v1687
      %1784 = vmatprep.subr.bf16.mxu0 0
      %1785 = vmatpush2.bf16.msra.mxu0 0
      %1786 = vmatprep.subr.bf16.mxu0 0
      %1787 = vmatpush2.bf16.msra.mxu0 0
      %1788 = vmatprep.subr.bf16.mxu0 0
      %1789 = vmatpush2.bf16.msra.mxu0 0
      %1790 = vmatprep.subr.bf16.mxu0 0
      %1791 = vmatpush2.bf16.msra.mxu0 0
      %1792 = vmatprep.subr.bf16.mxu0 0
      %1793 = vmatpush2.bf16.msra.mxu0 0
      %1794 = vmatprep.subr.bf16.mxu0 0
      %1795 = vmatpush2.bf16.msra.mxu0 0
      %1796 = vmatprep.subr.bf16.mxu0 0
      %1797 = vmatpush2.bf16.msra.mxu0 0
      %1798 = vmatprep.subr.bf16.mxu0 0
      %1799 = vmatpush2.bf16.msra.mxu0 0
      %1800 = vmatprep.mubr.bf16.mxu0 0
      %1801 = vmatmul.mubr.bf16.gmra.mxu0 %v1565
      %v1802 = vpop.f32.mrf.mxu0
      %v1803 = vadd.f32 %v1754, %v1802
      %v1804 = vpop.f32.mrf.mxu0
      %v1805 = vpop.f32.mrf.mxu0
      %v1806 = vadd.f32 %v1757, %v1805
      %v1807 = vpop.f32.mrf.mxu0
      %1808 = vmatprep.mubr.bf16.mxu0 0
      %1809 = vmatmul.mubr.bf16.gmra.mxu0 %v1568
      %v1810 = vpop.f32.mrf.mxu0
      %v1811 = vadd.f32 %v1762, %v1810
      %v1812 = vpop.f32.mrf.mxu0
      %v1813 = vpop.f32.mrf.mxu0
      %v1814 = vadd.f32 %v1765, %v1813
      %v1815 = vpop.f32.mrf.mxu0
      %1816 = vdwg.mxu0
      %s1817 = smul.u32 %s393, 3
      %s1818 = smul.addr %s1817, 4
      %s1819 = scalar_lea.vmem [#allocation3], %s1818
      %v1820 = vld [vmem:[%s1819] sm:$0xff]
      %v1821 = vld [vmem:[%s1819 + $0x8] sm:$0xf]
      %v1822 = vld [vmem:[%s1819 + $0xc] sm:$0xff]
      %v1823 = vld [vmem:[%s1819 + $0x14] sm:$0xf]
      %v1824 = vld [vmem:[%s1819 + $0x18] sm:$0xff]
      %v1825 = vld [vmem:[%s1819 + $0x20] sm:$0xf]
      %v1826 = vld [vmem:[%s1819 + $0x24] sm:$0xff]
      %v1827 = vld [vmem:[%s1819 + $0x2c] sm:$0xf]
      %s1828 = scalar_lea.vmem %s3, 384
      %v1829 = vld [vmem:[%s1828] sm:$0xf]
      %v1830 = vld [vmem:[%s1828 + $0x4] sm:$0xf]
      %v1831 = vld [vmem:[%s1828 + $0x8] sm:$0xf]
      %v1832 = vld [vmem:[%s1828 + $0xc] sm:$0xf]
      %v1833 = vld [vmem:[%s1828 + $0x10] sm:$0xf]
      %v1834 = vld [vmem:[%s1828 + $0x14] sm:$0xf]
      %v1835 = vld [vmem:[%s1828 + $0x18] sm:$0xf]
      %v1836 = vld [vmem:[%s1828 + $0x1c] sm:$0xf]
      %v1837 = vld [vmem:[%s1828 + $0x20] sm:$0xf]
      %v1838 = vld [vmem:[%s1828 + $0x24] sm:$0xf]
      %v1839 = vld [vmem:[%s1828 + $0x28] sm:$0xf]
      %v1840 = vld [vmem:[%s1828 + $0x2c] sm:$0xf]
      %v1841 = vld [vmem:[%s1828 + $0x30] sm:$0xf]
      %v1842 = vld [vmem:[%s1828 + $0x34] sm:$0xf]
      %v1843 = vld [vmem:[%s1828 + $0x38] sm:$0xf]
      %v1844 = vld [vmem:[%s1828 + $0x3c] sm:$0xf]
      %v1845 = vld [vmem:[%s1828 + $0x40] sm:$0xf]
      %v1846 = vld [vmem:[%s1828 + $0x44] sm:$0xf]
      %v1847 = vld [vmem:[%s1828 + $0x48] sm:$0xf]
      %v1848 = vld [vmem:[%s1828 + $0x4c] sm:$0xf]
      %v1849 = vld [vmem:[%s1828 + $0x50] sm:$0xf]
      %v1850 = vld [vmem:[%s1828 + $0x54] sm:$0xf]
      %v1851 = vld [vmem:[%s1828 + $0x58] sm:$0xf]
      %v1852 = vld [vmem:[%s1828 + $0x5c] sm:$0xf]
      %v1853 = vld [vmem:[%s1828 + $0x60] sm:$0xf]
      %v1854 = vld [vmem:[%s1828 + $0x64] sm:$0xf]
      %v1855 = vld [vmem:[%s1828 + $0x68] sm:$0xf]
      %v1856 = vld [vmem:[%s1828 + $0x6c] sm:$0xf]
      %v1857 = vld [vmem:[%s1828 + $0x70] sm:$0xf]
      %v1858 = vld [vmem:[%s1828 + $0x74] sm:$0xf]
      %v1859 = vld [vmem:[%s1828 + $0x78] sm:$0xf]
      %v1860 = vld [vmem:[%s1828 + $0x7c] sm:$0xf]
      %v1861 = vld [vmem:[%s1828 + $0x80] sm:$0xf]
      %v1862 = vld [vmem:[%s1828 + $0x84] sm:$0xf]
      %v1863 = vld [vmem:[%s1828 + $0x88] sm:$0xf]
      %v1864 = vld [vmem:[%s1828 + $0x8c] sm:$0xf]
      %v1865 = vld [vmem:[%s1828 + $0x90] sm:$0xf]
      %v1866 = vld [vmem:[%s1828 + $0x94] sm:$0xf]
      %v1867 = vld [vmem:[%s1828 + $0x98] sm:$0xf]
      %v1868 = vld [vmem:[%s1828 + $0x9c] sm:$0xf]
      %v1869 = vld [vmem:[%s1828 + $0xa0] sm:$0xf]
      %v1870 = vld [vmem:[%s1828 + $0xa4] sm:$0xf]
      %v1871 = vld [vmem:[%s1828 + $0xa8] sm:$0xf]
      %v1872 = vld [vmem:[%s1828 + $0xac] sm:$0xf]
      %v1873 = vld [vmem:[%s1828 + $0xb0] sm:$0xf]
      %v1874 = vld [vmem:[%s1828 + $0xb4] sm:$0xf]
      %v1875 = vld [vmem:[%s1828 + $0xb8] sm:$0xf]
      %v1876 = vld [vmem:[%s1828 + $0xbc] sm:$0xf]
      %v1885 = vunpack.c.l.b16 %v1820
      %v1886 = vunpack.c.h.b16 %v1820
      %v1887 = vunpack.c.l.b16 %v1821
      %v1888 = vunpack.c.l.b16 %v1822
      %v1889 = vunpack.c.h.b16 %v1822
      %v1890 = vunpack.c.l.b16 %v1823
      %v1891 = vunpack.c.l.b16 %v1824
      %v1892 = vunpack.c.h.b16 %v1824
      %v1893 = vunpack.c.l.b16 %v1825
      %v1894 = vunpack.c.l.b16 %v1826
      %v1895 = vunpack.c.h.b16 %v1826
      %v1896 = vunpack.c.l.b16 %v1827
      %v1897 = vpack.c.b16 %v1888, %v1885
      %v1898 = vpack.c.b16 %v1889, %v1886
      %v1899 = vpack.c.b16 %v1890, %v1887
      %v1900 = vpack.c.b16 %v1894, %v1891
      %v1901 = vpack.c.b16 %v1895, %v1892
      %v1902 = vpack.c.b16 %v1896, %v1893
      %v1957 = vunpack.c.l.b16 %v1829
      %v1958 = vunpack.c.l.b16 %v1830
      %v1959 = vunpack.c.l.b16 %v1831
      %v1960 = vunpack.c.l.b16 %v1832
      %v1961 = vunpack.c.l.b16 %v1833
      %v1962 = vunpack.c.l.b16 %v1834
      %v1963 = vunpack.c.l.b16 %v1835
      %v1964 = vunpack.c.l.b16 %v1836
      %v1965 = vunpack.c.l.b16 %v1837
      %v1966 = vunpack.c.l.b16 %v1838
      %v1967 = vunpack.c.l.b16 %v1839
      %v1968 = vunpack.c.l.b16 %v1840
      %v1969 = vunpack.c.l.b16 %v1841
      %v1970 = vunpack.c.l.b16 %v1842
      %v1971 = vunpack.c.l.b16 %v1843
      %v1972 = vunpack.c.l.b16 %v1844
      %v1973 = vunpack.c.l.b16 %v1845
      %v1974 = vunpack.c.l.b16 %v1846
      %v1975 = vunpack.c.l.b16 %v1847
      %v1976 = vunpack.c.l.b16 %v1848
      %v1977 = vunpack.c.l.b16 %v1849
      %v1978 = vunpack.c.l.b16 %v1850
      %v1979 = vunpack.c.l.b16 %v1851
      %v1980 = vunpack.c.l.b16 %v1852
      %v1981 = vunpack.c.l.b16 %v1853
      %v1982 = vunpack.c.l.b16 %v1854
      %v1983 = vunpack.c.l.b16 %v1855
      %v1984 = vunpack.c.l.b16 %v1856
      %v1985 = vunpack.c.l.b16 %v1857
      %v1986 = vunpack.c.l.b16 %v1858
      %v1987 = vunpack.c.l.b16 %v1859
      %v1988 = vunpack.c.l.b16 %v1860
      %v1989 = vunpack.c.l.b16 %v1861
      %v1990 = vunpack.c.l.b16 %v1862
      %v1991 = vunpack.c.l.b16 %v1863
      %v1992 = vunpack.c.l.b16 %v1864
      %v1993 = vunpack.c.l.b16 %v1865
      %v1994 = vunpack.c.l.b16 %v1866
      %v1995 = vunpack.c.l.b16 %v1867
      %v1996 = vunpack.c.l.b16 %v1868
      %v1997 = vunpack.c.l.b16 %v1869
      %v1998 = vunpack.c.l.b16 %v1870
      %v1999 = vunpack.c.l.b16 %v1871
      %v2000 = vunpack.c.l.b16 %v1872
      %v2001 = vunpack.c.l.b16 %v1873
      %v2002 = vunpack.c.l.b16 %v1874
      %v2003 = vunpack.c.l.b16 %v1875
      %v2004 = vunpack.c.l.b16 %v1876
      %v2005 = vpack.c.b16 %v1958, %v1957
      %v2006 = vpack.c.b16 %v1960, %v1959
      %v2007 = vpack.c.b16 %v1962, %v1961
      %v2008 = vpack.c.b16 %v1964, %v1963
      %v2009 = vpack.c.b16 %v1966, %v1965
      %v2010 = vpack.c.b16 %v1968, %v1967
      %v2011 = vpack.c.b16 %v1970, %v1969
      %v2012 = vpack.c.b16 %v1972, %v1971
      %v2013 = vpack.c.b16 %v1974, %v1973
      %v2014 = vpack.c.b16 %v1976, %v1975
      %v2015 = vpack.c.b16 %v1978, %v1977
      %v2016 = vpack.c.b16 %v1980, %v1979
      %v2017 = vpack.c.b16 %v1982, %v1981
      %v2018 = vpack.c.b16 %v1984, %v1983
      %v2019 = vpack.c.b16 %v1986, %v1985
      %v2020 = vpack.c.b16 %v1988, %v1987
      %v2021 = vpack.c.b16 %v1990, %v1989
      %v2022 = vpack.c.b16 %v1992, %v1991
      %v2023 = vpack.c.b16 %v1994, %v1993
      %v2024 = vpack.c.b16 %v1996, %v1995
      %v2025 = vpack.c.b16 %v1998, %v1997
      %v2026 = vpack.c.b16 %v2000, %v1999
      %v2027 = vpack.c.b16 %v2002, %v2001
      %v2028 = vpack.c.b16 %v2004, %v2003
      %2053 = vmatprep.subr.bf16.mxu0 0
      %2054 = vmatpush1.bf16.msra.mxu0 %v2012
      %2055 = vmatprep.subr.bf16.mxu0 0
      %2056 = vmatpush1.bf16.msra.mxu0 %v2011
      %2057 = vmatprep.subr.bf16.mxu0 0
      %2058 = vmatpush1.bf16.msra.mxu0 %v2010
      %2059 = vmatprep.subr.bf16.mxu0 0
      %2060 = vmatpush1.bf16.msra.mxu0 %v2009
      %2061 = vmatprep.subr.bf16.mxu0 0
      %2062 = vmatpush1.bf16.msra.mxu0 %v2008
      %2063 = vmatprep.subr.bf16.mxu0 0
      %2064 = vmatpush1.bf16.msra.mxu0 %v2007
      %2065 = vmatprep.subr.bf16.mxu0 0
      %2066 = vmatpush1.bf16.msra.mxu0 %v2006
      %2067 = vmatprep.subr.bf16.mxu0 0
      %2068 = vmatpush1.bf16.msra.mxu0 %v2005
      %2069 = vmatprep.subr.bf16.mxu0 0
      %2070 = vmatpush2.bf16.msra.mxu0 %v2020
      %2071 = vmatprep.subr.bf16.mxu0 0
      %2072 = vmatpush2.bf16.msra.mxu0 %v2019
      %2073 = vmatprep.subr.bf16.mxu0 0
      %2074 = vmatpush2.bf16.msra.mxu0 %v2018
      %2075 = vmatprep.subr.bf16.mxu0 0
      %2076 = vmatpush2.bf16.msra.mxu0 %v2017
      %2077 = vmatprep.subr.bf16.mxu0 0
      %2078 = vmatpush2.bf16.msra.mxu0 %v2016
      %2079 = vmatprep.subr.bf16.mxu0 0
      %2080 = vmatpush2.bf16.msra.mxu0 %v2015
      %2081 = vmatprep.subr.bf16.mxu0 0
      %2082 = vmatpush2.bf16.msra.mxu0 %v2014
      %2083 = vmatprep.subr.bf16.mxu0 0
      %2084 = vmatpush2.bf16.msra.mxu0 %v2013
      %2085 = vmatprep.mubr.bf16.mxu0 %v1898
      %2086 = vmatmul.mubr.bf16.gmra.mxu0 %v1897
      %v2087 = vpop.f32.mrf.mxu0
      %v2088 = vadd.f32 0.0, %v2087
      %v2089 = vpop.f32.mrf.mxu0
      %v2090 = vpop.f32.mrf.mxu0
      %v2091 = vadd.f32 0.0, %v2090
      %v2092 = vpop.f32.mrf.mxu0
      %2093 = vmatprep.mubr.bf16.mxu0 %v1901
      %2094 = vmatmul.mubr.bf16.gmra.mxu0 %v1900
      %v2095 = vpop.f32.mrf.mxu0
      %v2096 = vadd.f32 0.0, %v2095
      %v2097 = vpop.f32.mrf.mxu0
      %v2098 = vpop.f32.mrf.mxu0
      %v2099 = vadd.f32 0.0, %v2098
      %v2100 = vpop.f32.mrf.mxu0
      %2101 = vdwg.mxu0
      %2102 = vmatprep.subr.bf16.mxu0 0
      %2103 = vmatpush1.bf16.msra.mxu0 %v2028
      %2104 = vmatprep.subr.bf16.mxu0 0
      %2105 = vmatpush1.bf16.msra.mxu0 %v2027
      %2106 = vmatprep.subr.bf16.mxu0 0
      %2107 = vmatpush1.bf16.msra.mxu0 %v2026
      %2108 = vmatprep.subr.bf16.mxu0 0
      %2109 = vmatpush1.bf16.msra.mxu0 %v2025
      %2110 = vmatprep.subr.bf16.mxu0 0
      %2111 = vmatpush1.bf16.msra.mxu0 %v2024
      %2112 = vmatprep.subr.bf16.mxu0 0
      %2113 = vmatpush1.bf16.msra.mxu0 %v2023
      %2114 = vmatprep.subr.bf16.mxu0 0
      %2115 = vmatpush1.bf16.msra.mxu0 %v2022
      %2116 = vmatprep.subr.bf16.mxu0 0
      %2117 = vmatpush1.bf16.msra.mxu0 %v2021
      %2118 = vmatprep.subr.bf16.mxu0 0
      %2119 = vmatpush2.bf16.msra.mxu0 0
      %2120 = vmatprep.subr.bf16.mxu0 0
      %2121 = vmatpush2.bf16.msra.mxu0 0
      %2122 = vmatprep.subr.bf16.mxu0 0
      %2123 = vmatpush2.bf16.msra.mxu0 0
      %2124 = vmatprep.subr.bf16.mxu0 0
      %2125 = vmatpush2.bf16.msra.mxu0 0
      %2126 = vmatprep.subr.bf16.mxu0 0
      %2127 = vmatpush2.bf16.msra.mxu0 0
      %2128 = vmatprep.subr.bf16.mxu0 0
      %2129 = vmatpush2.bf16.msra.mxu0 0
      %2130 = vmatprep.subr.bf16.mxu0 0
      %2131 = vmatpush2.bf16.msra.mxu0 0
      %2132 = vmatprep.subr.bf16.mxu0 0
      %2133 = vmatpush2.bf16.msra.mxu0 0
      %2134 = vmatprep.mubr.bf16.mxu0 0
      %2135 = vmatmul.mubr.bf16.gmra.mxu0 %v1899
      %v2136 = vpop.f32.mrf.mxu0
      %v2137 = vadd.f32 %v2088, %v2136
      %v2138 = vpop.f32.mrf.mxu0
      %v2139 = vpop.f32.mrf.mxu0
      %v2140 = vadd.f32 %v2091, %v2139
      %v2141 = vpop.f32.mrf.mxu0
      %2142 = vmatprep.mubr.bf16.mxu0 0
      %2143 = vmatmul.mubr.bf16.gmra.mxu0 %v1902
      %v2144 = vpop.f32.mrf.mxu0
      %v2145 = vadd.f32 %v2096, %v2144
      %v2146 = vpop.f32.mrf.mxu0
      %v2147 = vpop.f32.mrf.mxu0
      %v2148 = vadd.f32 %v2099, %v2147
      %v2149 = vpop.f32.mrf.mxu0
      %2150 = vdwg.mxu0
      %v2151 = vadd.f32 %v1803, %v2137
      %v2152 = vadd.f32 %v1806, %v2140
      %v2153 = vadd.f32 %v1811, %v2145
      %v2154 = vadd.f32 %v1814, %v2148
      %v2155 = vld [vmem:[%s4] sm:$0x1]
      %v2157 = vlaneseq
      %v2158 = vshrl.u32 %v2157, 7
      %v2159 = vsub.s32 0, %v2158
      %v2160 = vrot.slane %v2155, %v2159
      %v2162 = vadd.f32 %v2151, %v2160
      %v2163 = vadd.f32 %v2152, %v2160
      %v2164 = vadd.f32 %v2153, %v2160
      %v2165 = vadd.f32 %v2154, %v2160
      %v2166 = vand.u32 2147483647, %v2162
      %v2167 = vand.u32 2147483647, %v2163
      %v2168 = vand.u32 2147483647, %v2164
      %v2169 = vand.u32 2147483647, %v2165
      %v2170 = vmul.f32 %v2166, 0.70710677
      %v2171 = vmul.f32 %v2167, 0.70710677
      %v2172 = vmul.f32 %v2168, 0.70710677
      %v2173 = vmul.f32 %v2169, 0.70710677
      %v2174 = vmul.f32 %v2170, 0.3275911
      %v2175 = vmul.f32 %v2171, 0.3275911
      %v2176 = vmul.f32 %v2172, 0.3275911
      %v2177 = vmul.f32 %v2173, 0.3275911
      %v2178 = vadd.f32 %v2174, 1.0
      %v2179 = vadd.f32 %v2175, 1.0
      %v2180 = vadd.f32 %v2176, 1.0
      %v2181 = vadd.f32 %v2177, 1.0
      %v2182 = vrcp.pop %v2178
      %v2183 = vrcp.pop %v2179
      %v2184 = vrcp.pop %v2180
      %v2185 = vrcp.pop %v2181
      %v2186 = vmul.f32 %v2182, 1.0614054
      %v2187 = vmul.f32 %v2183, 1.0614054
      %v2188 = vmul.f32 %v2184, 1.0614054
      %v2189 = vmul.f32 %v2185, 1.0614054
      %v2190 = vadd.f32 %v2186, -1.4531521
      %v2191 = vadd.f32 %v2187, -1.4531521
      %v2192 = vadd.f32 %v2188, -1.4531521
      %v2193 = vadd.f32 %v2189, -1.4531521
      %v2194 = vmul.f32 %v2190, %v2182
      %v2195 = vmul.f32 %v2191, %v2183
      %v2196 = vmul.f32 %v2192, %v2184
      %v2197 = vmul.f32 %v2193, %v2185
      %v2198 = vadd.f32 %v2194, 1.4214138
      %v2199 = vadd.f32 %v2195, 1.4214138
      %v2200 = vadd.f32 %v2196, 1.4214138
      %v2201 = vadd.f32 %v2197, 1.4214138
      %v2202 = vmul.f32 %v2198, %v2182
      %v2203 = vmul.f32 %v2199, %v2183
      %v2204 = vmul.f32 %v2200, %v2184
      %v2205 = vmul.f32 %v2201, %v2185
      %v2206 = vadd.f32 %v2202, -0.28449672
      %v2207 = vadd.f32 %v2203, -0.28449672
      %v2208 = vadd.f32 %v2204, -0.28449672
      %v2209 = vadd.f32 %v2205, -0.28449672
      %v2210 = vmul.f32 %v2206, %v2182
      %v2211 = vmul.f32 %v2207, %v2183
      %v2212 = vmul.f32 %v2208, %v2184
      %v2213 = vmul.f32 %v2209, %v2185
      %v2214 = vadd.f32 %v2210, 0.2548296
      %v2215 = vadd.f32 %v2211, 0.2548296
      %v2216 = vadd.f32 %v2212, 0.2548296
      %v2217 = vadd.f32 %v2213, 0.2548296
      %v2218 = vmul.f32 %v2214, %v2182
      %v2219 = vmul.f32 %v2215, %v2183
      %v2220 = vmul.f32 %v2216, %v2184
      %v2221 = vmul.f32 %v2217, %v2185
      %v2222 = vsub.f32 0.0, %v2170
      %v2223 = vsub.f32 0.0, %v2171
      %v2224 = vsub.f32 0.0, %v2172
      %v2225 = vsub.f32 0.0, %v2173
      %v2226 = vmul.f32 %v2222, %v2170
      %v2227 = vmul.f32 %v2223, %v2171
      %v2228 = vmul.f32 %v2224, %v2172
      %v2229 = vmul.f32 %v2225, %v2173
      %v2230 = vmul.f32 %v2226, 1.442695
      %v2231 = vpow.pop %v2230
      %v2232 = vmul.f32 %v2227, 1.442695
      %v2233 = vpow.pop %v2232
      %v2234 = vmul.f32 %v2228, 1.442695
      %v2235 = vpow.pop %v2234
      %v2236 = vmul.f32 %v2229, 1.442695
      %v2237 = vpow.pop %v2236
      %v2238 = vmul.f32 %v2218, %v2231
      %v2239 = vmul.f32 %v2219, %v2233
      %v2240 = vmul.f32 %v2220, %v2235
      %v2241 = vmul.f32 %v2221, %v2237
      %v2242 = vsub.f32 1.0, %v2238
      %v2243 = vsub.f32 1.0, %v2239
      %v2244 = vsub.f32 1.0, %v2240
      %v2245 = vsub.f32 1.0, %v2241
      %vm2246 = vcmp.ge.f32.partialorder %v2162, 0.0
      %vm2247 = vcmp.ge.f32.partialorder %v2163, 0.0
      %vm2248 = vcmp.ge.f32.partialorder %v2164, 0.0
      %vm2249 = vcmp.ge.f32.partialorder %v2165, 0.0
      %v2250 = vsub.f32 0.0, %v2242
      %v2251 = vsub.f32 0.0, %v2243
      %v2252 = vsub.f32 0.0, %v2244
      %v2253 = vsub.f32 0.0, %v2245
      %v2254 = vsel %vm2246, %v2242, %v2250
      %v2255 = vsel %vm2247, %v2243, %v2251
      %v2256 = vsel %vm2248, %v2244, %v2252
      %v2257 = vsel %vm2249, %v2245, %v2253
      %v2258 = vmul.f32 %v2162, 0.5
      %v2259 = vmul.f32 %v2163, 0.5
      %v2260 = vmul.f32 %v2164, 0.5
      %v2261 = vmul.f32 %v2165, 0.5
      %v2262 = vadd.f32 %v2254, 1.0
      %v2263 = vadd.f32 %v2255, 1.0
      %v2264 = vadd.f32 %v2256, 1.0
      %v2265 = vadd.f32 %v2257, 1.0
      %v2266 = vmul.f32 %v2258, %v2262
      %v2267 = vmul.f32 %v2259, %v2263
      %v2268 = vmul.f32 %v2260, %v2264
      %v2269 = vmul.f32 %v2261, %v2265
      %v2270 = vpack.c.bf16 %v2267, %v2266
      %v2271 = vpack.c.bf16 %v2269, %v2268
      %v2274 = vunpack.c.l.b16 %v2270
      %v2275 = vunpack.c.h.b16 %v2270
      %v2276 = vunpack.c.l.b16 %v2271
      %v2277 = vunpack.c.h.b16 %v2271
      %v2278 = vpack.c.b16 %v2274, %v2274
      %v2279 = vpack.c.b16 %v2275, %v2275
      %v2280 = vpack.c.b16 %v2276, %v2276
      %v2281 = vpack.c.b16 %v2277, %v2277
      %2286 = vst [vmem:[%s224] sm:$0xf] %v2278
      %2287 = vst [vmem:[%s224 + $0x4] sm:$0xf] %v2279
      %2288 = vst [vmem:[%s224 + $0x8] sm:$0xf] %v2280
      %2289 = vst [vmem:[%s224 + $0xc] sm:$0xf] %v2281
      %p2290 = scmp.lt.s32.totalorder %s16, 1
      %s2291 = scalar_select %p2290, %s16, 1
      %s2292 = smul.addr %s2291, 4
      %s2293 = smul.addr %s2292, 4
      %s2294 = scalar_lea.vmem %s5, %s2293
      // Predicated region
      $region41: #{downsample_forward.1} parent=39 // pred_check
        %p2295 = pneg %p144
      $region42: #{downsample_forward.1} parent=39 // pred_check_branch
        %2297 = sbr.rel (%p2295) target = $region44
      $region43: #{downsample_forward.1} parent=39 // pred_region
        _
      $region44: #{downsample_forward.1} parent=39 // pred_fallthru
        _
    $region40: #{downsample_forward.1} parent=5 // pred_fallthru
      _
    %p2298 = scmp.le.s32.totalorder 2, %s11
    // Predicated region
    $region45: #{downsample_forward.1} parent=5 // pred_check
      %p2299 = pneg %p2298
    $region46: #{downsample_forward.1} parent=5 // pred_check_branch
      %2301 = sbr.rel (%p2299) target = $region48
    $region47: #{downsample_forward.1} parent=5 // pred_region
      %s2302 = ssub.s32 %s11, 2
      // Predicated region
      $region49: #{downsample_forward.1} parent=47 // pred_check
        %p2303 = pneg %p150
      $region50: #{downsample_forward.1} parent=47 // pred_check_branch
        %2305 = sbr.rel (%p2303) target = $region52
      $region51: #{downsample_forward.1} parent=47 // pred_region
        %p2306 = scmp.lt.s32.totalorder %s17, 1
        %s2307 = scalar_select %p2306, %s17, 1
        %s2308 = smul.addr %s2307, 4
        %s2309 = smul.addr %s2308, 4
        %s2310 = scalar_lea.vmem %s5, %s2309
      $region52: #{downsample_forward.1} parent=47 // pred_fallthru
        _
    $region48: #{downsample_forward.1} parent=5 // pred_fallthru
      _
  $region6: #{downsample_forward.1} parent=0 // loop_footer
    %s15 = sadd.s32 1, %s11
  $region7: #{downsample_forward.1} parent=0 // loop_footer_branch
    %10 = sbr.rel target = $region3
  $region8: #{downsample_forward.1} parent=0 // loop_exit
    _

</llo_original>
